<compile_context>
chip_gen: v7x
topology: tpu7x:2x2x1
jax: 0.10.0
libtpu: 0.0.40
codegen_flags: <defaults>
</compile_context>

<pallas_src>
import jax
import jax.numpy as jnp
from jax.experimental import pallas as pl
from jax.experimental.pallas import tpu as pltpu

# eval-mode BatchNorm1d with default running stats (mean=0, var=1, gamma=1, beta=0)
BN_SCALE = (1.0 + 1e-5) ** -0.5
PACK_W = 128  # lane width of the packed parameter buffers

_VMEM = pl.BlockSpec(memory_space=pltpu.MemorySpace.VMEM)


def _pad8(r):
    return -(-r // 8) * 8


class _RowPacker:
    """Packs many small 2-D f32 arrays into one [R, width] buffer.

    Every array starts on an 8-row (sublane) boundary and occupies lanes
    [0, ncols), so a static kernel-side slice of the packed ref has exactly
    the same physical layout as the original array (free view, no relayout).
    """

    def __init__(self, width=PACK_W):
        self.width = width
        self._blocks = []
        self.offsets = {}
        self._row = 0

    def add(self, name, arr):
        arr = jnp.asarray(arr, jnp.float32)
        r, c = arr.shape
        assert c <= self.width, (name, arr.shape, self.width)
        rp = _pad8(r)
        blk = jnp.zeros((rp, self.width), jnp.float32).at[:r, :c].set(arr)
        self._blocks.append(blk)
        self.offsets[name] = self._row
        self._row += rp

    def pack(self):
        return jnp.concatenate(self._blocks, axis=0)


# ------------------------- fused whole-forward kernel ----------------------- #

def _make_forward_kernel(w_off, d_off, num_layer, num_mlp_layers,
                         n, d, g, head_dims):
    hdim = 2 * d

    def kernel(dyn_ref, adj_ref, w_ref, emb_ref, pred_ref):
        def wblk(name, rows, cols):          # static slice of the weight pack
            r0 = w_off[name]
            return w_ref[r0:r0 + rows, 0:cols]

        def dblk(name, rows, cols):          # static slice of the per-call pack
            r0 = d_off[name]
            return dyn_ref[r0:r0 + rows, 0:cols]

        pstk = dblk('pstack', 2 * g, n)      # rows [0,g): mean-pool, [g,2g): sum-pool
        pt = dblk('pt', n, g)                # [n, g] one-hot node->graph mask (P^T)
        x = dblk('x', n, d)                  # node features
        adj = adj_ref[...]                   # [n, n] 0/1 adjacency (f32, exact)

        h = x
        vn = jnp.zeros((g, d), jnp.float32)  # virtual-node embedding init = 0

        for layer in range(num_layer):
            w1 = wblk(f'c{layer}_w1', d, hdim)
            b1 = wblk(f'c{layer}_b1', 1, hdim)
            w2 = wblk(f'c{layer}_w2', hdim, d)
            b2 = wblk(f'c{layer}_b2', 1, d)

            # add each node's graph virtual-node embedding: VPU mask-broadcast
            # (not a K=G matmul).  Layer 0 has vn == 0, skip entirely.
            if layer == 0:
                h_in = h
            else:
                bc = pt[:, 0:1] * vn[0:1, :]
                for gi in range(1, g):
                    bc = bc + pt[:, gi:gi + 1] * vn[gi:gi + 1, :]
                h_in = h + bc

            # mean pooling (node_emb output) + sum pooling (vn update) of h_in
            # in a single stacked [2G,N] x [N,D] matmul; write the mean slice
            # straight into the emb output (layer l lives at lanes (l+1)*D..).
            pooled = jnp.dot(pstk, h_in, preferred_element_type=jnp.float32)
            emb_ref[:, (layer + 1) * d:(layer + 2) * d] = pooled[0:g, :]

            # GIN conv: mlp((1+eps)*x + sum_j relu(x_j + edge_emb)); eps = 0,
            # edge encoder identity -> edge_emb contributes 0.
            agg = jnp.dot(adj, jnp.maximum(h_in, 0.0),
                          preferred_element_type=jnp.float32)
            pre = h_in + agg

            # GIN MLP: Linear(D,2D) -> BN -> ReLU -> Linear(2D,D) -> layer BN.
            # BN scales are pre-folded into w1/b1/w2/b2.
            mid = jnp.maximum(
                jnp.dot(pre, w1, preferred_element_type=jnp.float32) + b1, 0.0)
            out = jnp.dot(mid, w2, preferred_element_type=jnp.float32) + b2
            if layer < num_layer - 1:
                out = jnp.maximum(out, 0.0)  # ReLU on all but the last layer
            # dropout is identity in eval mode

            if layer < num_layer - 1:
                # vn update: global_add_pool(h_in) + vn -> (Linear,BN,ReLU) x 2
                vw1 = wblk(f'v{layer}_w1', d, hdim)
                vb1 = wblk(f'v{layer}_b1', 1, hdim)
                vw2 = wblk(f'v{layer}_w2', hdim, d)
                vb2 = wblk(f'v{layer}_b2', 1, d)
                vn_tmp = pooled[g:2 * g, :] + vn
                t = jnp.maximum(
                    jnp.dot(vn_tmp, vw1, preferred_element_type=jnp.float32) + vb1,
                    0.0)
                vn = jnp.maximum(
                    jnp.dot(t, vw2, preferred_element_type=jnp.float32) + vb2, 0.0)

            h = out

        # graph embedding = mean pool of final node state (JK == 'last'),
        # stored lane-aligned at lanes [0, D) of the emb output.
        hg = jnp.dot(pstk[0:g, :], h, preferred_element_type=jnp.float32)
        emb_ref[:, 0:d] = hg

        # final MLP head; last layer's weights/bias are column-padded so the
        # prediction store is a lane-dense 128-wide vst.
        pred = hg
        for j in range(num_mlp_layers):
            in_sz, out_sz = head_dims[j]
            fw = wblk(f'f{j}_w', in_sz, out_sz)
            fb = wblk(f'f{j}_b', 1, out_sz)
            pred = jnp.dot(pred, fw, preferred_element_type=jnp.float32) + fb
            if j < num_mlp_layers - 1:
                pred = jnp.maximum(pred, 0.0)
        pred_ref[...] = pred

    return kernel


def gnn_forward(dyn_pack, adj, w_pack, *, d_off, w_off, num_layer,
                num_mlp_layers, head_dims, n, d, g, pred_pad):
    hdim = 2 * d
    emb_w = (num_layer + 1) * d
    out_shapes = (
        jax.ShapeDtypeStruct((g, emb_w), jnp.float32),
        jax.ShapeDtypeStruct((g, pred_pad), jnp.float32),
    )
    flops = (num_layer * (2 * n * n * d + 2 * n * d * hdim + 2 * n * hdim * d
                          + 2 * (2 * g) * n * d)
             + max(num_layer - 1, 0) * (2 * g * d * hdim + 2 * g * hdim * d)
             + 2 * g * n * d
             + sum(2 * g * i * o for i, o in head_dims))
    bytes_accessed = 4 * (dyn_pack.size + adj.size + w_pack.size
                          + g * emb_w + g * pred_pad)
    return pl.pallas_call(
        _make_forward_kernel(w_off, d_off, num_layer, num_mlp_layers,
                             n, d, g, head_dims),
        out_shape=out_shapes,
        in_specs=[_VMEM, _VMEM, _VMEM],
        out_specs=(_VMEM, _VMEM),
        cost_estimate=pl.CostEstimate(flops=int(flops), transcendentals=0,
                                      bytes_accessed=int(bytes_accessed)),
    )(dyn_pack, adj, w_pack)


# --------------------------- parameters & model ----------------------------- #

def init_linear(key, in_dim, out_dim):
    """PyTorch nn.Linear default init; weight stored as [in, out] (= weight.T)."""
    kw, kb = jax.random.split(key)
    bound = 1.0 / (in_dim ** 0.5)
    w = jax.random.uniform(kw, (in_dim, out_dim), jnp.float32, -bound, bound)
    b = jax.random.uniform(kb, (1, out_dim), jnp.float32, -bound, bound)
    return w, b


class GNNPallas:
    """JK='last', graph_pooling='mean', virtual_node=True, residual=False,
    dim_pooling=False, num_tasks=1, num_mlp_layers=1, eval mode."""

    def __init__(self, key, num_classes, num_tasks, num_layer, emb_dim,
                 num_mlp_layers=1):
        self.num_classes = num_classes
        self.num_tasks = num_tasks
        self.num_layer = num_layer
        self.emb_dim = emb_dim
        self.num_mlp_layers = num_mlp_layers
        d, hdim = emb_dim, 2 * emb_dim

        n_keys = num_layer * 2 + max(num_layer - 1, 0) * 2 + num_mlp_layers
        keys = iter(jax.random.split(key, n_keys))

        # GIN conv MLPs: Linear(D, 2D), Linear(2D, D)
        self.conv_params = []
        for _ in range(num_layer):
            w1, b1 = init_linear(next(keys), d, hdim)
            w2, b2 = init_linear(next(keys), hdim, d)
            self.conv_params.append((w1, b1, w2, b2))

        # virtual-node MLPs (one per layer except the last)
        self.vn_mlp_params = []
        for _ in range(num_layer - 1):
            p1 = init_linear(next(keys), d, hdim)
            p2 = init_linear(next(keys), hdim, d)
            self.vn_mlp_params.append((p1, p2))

        # final MLP head (set_mlp): num_mlp_layers == 1 -> single Linear
        self.final_params = []
        for i in range(num_mlp_layers):
            in_size = hdim if i > 0 else emb_dim          # graph_emb_dim (JK != 'concat')
            out_size = hdim if i < num_mlp_layers - 1 else num_classes * num_tasks
            self.final_params.append(init_linear(next(keys), in_size, out_size))

        # lane-dense padded width of the prediction output
        raw_out = num_classes * num_tasks
        self.pred_pad = -(-raw_out // 128) * 128
        pack_w = max(PACK_W, self.pred_pad)

        # ---- pack all weights/biases (BN folded) into ONE buffer ----
        s = BN_SCALE
        pk = _RowPacker(pack_w)
        for l, (w1, b1, w2, b2) in enumerate(self.conv_params):
            pk.add(f'c{l}_w1', w1 * s); pk.add(f'c{l}_b1', b1 * s)
            pk.add(f'c{l}_w2', w2 * s); pk.add(f'c{l}_b2', b2 * s)
        for l, ((vw1, vb1), (vw2, vb2)) in enumerate(self.vn_mlp_params):
            pk.add(f'v{l}_w1', vw1 * s); pk.add(f'v{l}_b1', vb1 * s)
            pk.add(f'v{l}_w2', vw2 * s); pk.add(f'v{l}_b2', vb2 * s)
        self.head_dims = []
        for i, (w, b) in enumerate(self.final_params):
            in_sz, out_sz = w.shape
            if i == num_mlp_layers - 1:                    # pad last layer cols
                wp = jnp.zeros((in_sz, self.pred_pad), jnp.float32)
                wp = wp.at[:, :out_sz].set(w)
                bp = jnp.zeros((1, self.pred_pad), jnp.float32)
                bp = bp.at[:, :out_sz].set(b)
                out_pad = self.pred_pad
            else:
                wp, bp, out_pad = w, b, out_sz
            pk.add(f'f{i}_w', wp); pk.add(f'f{i}_b', bp)
            self.head_dims.append((in_sz, out_pad))
        self.w_pack = pk.pack()
        self.w_off = pk.offsets

    def forward(self, x, adj, pool_mat, inv_count):
        n, d = x.shape
        g = pool_mat.shape[0]
        # per-call dynamic pack: stacked pooling matrices (mean-scaled & sum),
        # node->graph one-hot mask P^T, and the node features -> ONE DMA.
        dyn = _RowPacker(PACK_W)
        p_mean = pool_mat * inv_count          # fold 1/count into the pool rows
        dyn.add('pstack', jnp.concatenate([p_mean, pool_mat], axis=0))
        dyn.add('pt', pool_mat.T)
        dyn.add('x', x)
        dyn_pack = dyn.pack()

        emb, pred = gnn_forward(
            dyn_pack, adj.astype(jnp.float32), self.w_pack,
            d_off=dyn.offsets, w_off=self.w_off,
            num_layer=self.num_layer, num_mlp_layers=self.num_mlp_layers,
            head_dims=self.head_dims, n=n, d=d, g=g, pred_pad=self.pred_pad)

        h_graph = emb[:, :d]                                   # lanes [0, D)
        node_emb = [emb[:, (l + 1) * d:(l + 2) * d]
                    for l in range(self.num_layer)] + [h_graph]
        prediction = pred[:, :self.num_classes * self.num_tasks]
        prediction = prediction.reshape(-1, self.num_classes)  # num_tasks == 1
        return prediction, h_graph, node_emb


# ---------------------------------- driver ---------------------------------- #

if __name__ == "__main__":
    N, D, G = 32, 32, 2                 # nodes, emb_dim, graphs
    num_classes, num_tasks, num_layer = 3, 1, 3

    key = jax.random.PRNGKey(0)
    k_model, k_x, k_adj = jax.random.split(key, 3)

    model = GNNPallas(k_model, num_classes=num_classes, num_tasks=num_tasks,
                      num_layer=num_layer, emb_dim=D, num_mlp_layers=1)

    # node features (node_encoder is identity -> already emb_dim-wide floats)
    x = jax.random.normal(k_x, (N, D), jnp.float32)

    # batch assignment: nodes 0..15 -> graph 0, 16..31 -> graph 1
    batch = jnp.concatenate([jnp.zeros(16, jnp.int32), jnp.ones(16, jnp.int32)])
    pool_mat = (batch[None, :] == jnp.arange(G)[:, None]).astype(jnp.float32)
    inv_count = 1.0 / jnp.sum(pool_mat, axis=1, keepdims=True)

    # deterministic symmetric block-diagonal adjacency, no self loops
    raw = (jax.random.uniform(k_adj, (N, N)) < 0.2).astype(jnp.float32)
    same_graph = (batch[:, None] == batch[None, :]).astype(jnp.float32)
    adj = raw * same_graph
    adj = jnp.maximum(adj, adj.T) * (1.0 - jnp.eye(N, dtype=jnp.float32))

    prediction, h_graph, node_emb = model.forward(x, adj, pool_mat, inv_count)
    jax.block_until_ready((prediction, h_graph, node_emb))

    assert prediction.shape == (G, num_classes)
    assert h_graph.shape == (G, D)
    assert len(node_emb) == num_layer + 1 and node_emb[0].shape == (G, D)
    print("KERNEL_OK")
</pallas_src>

<mosaic_0001>
module attributes {stable_mosaic.version = 11 : i64} {
  func.func @kernel(%arg0: memref<72x128xf32, #tpu.memory_space<vmem>>, %arg1: memref<32x32xf32, #tpu.memory_space<vmem>>, %arg2: memref<600x128xf32, #tpu.memory_space<vmem>>, %arg3: memref<2x128xf32, #tpu.memory_space<vmem>>, %arg4: memref<2x128xf32, #tpu.memory_space<vmem>>) attributes {dimension_semantics = [], scalar_prefetch = 0 : i64, scratch_operands = 0 : i64, tpu.core_type = #tpu.core_type<tc>} {
    %c0 = arith.constant 0 : index
    %c0_0 = arith.constant 0 : index
    %0 = vector.load %arg0[%c0, %c0_0] : memref<72x128xf32, #tpu.memory_space<vmem>>, vector<4x32xf32>
    %c8 = arith.constant 8 : index
    %c0_1 = arith.constant 0 : index
    %1 = vector.load %arg0[%c8, %c0_1] : memref<72x128xf32, #tpu.memory_space<vmem>>, vector<32x2xf32>
    %c40 = arith.constant 40 : index
    %c0_2 = arith.constant 0 : index
    %2 = vector.load %arg0[%c40, %c0_2] : memref<72x128xf32, #tpu.memory_space<vmem>>, vector<32x32xf32>
    %c0_3 = arith.constant 0 : index
    %c0_4 = arith.constant 0 : index
    %3 = vector.load %arg1[%c0_3, %c0_4] : memref<32x32xf32, #tpu.memory_space<vmem>>, vector<32x32xf32>
    %cst = arith.constant 0.000000e+00 : f32
    %4 = vector.broadcast %cst : f32 to vector<2x32xf32>
    %c0_5 = arith.constant 0 : index
    %c0_6 = arith.constant 0 : index
    %5 = vector.load %arg2[%c0_5, %c0_6] : memref<600x128xf32, #tpu.memory_space<vmem>>, vector<32x64xf32>
    %c32 = arith.constant 32 : index
    %c0_7 = arith.constant 0 : index
    %6 = vector.load %arg2[%c32, %c0_7] : memref<600x128xf32, #tpu.memory_space<vmem>>, vector<1x64xf32>
    %c40_8 = arith.constant 40 : index
    %c0_9 = arith.constant 0 : index
    %7 = vector.load %arg2[%c40_8, %c0_9] : memref<600x128xf32, #tpu.memory_space<vmem>>, vector<64x32xf32>
    %c104 = arith.constant 104 : index
    %c0_10 = arith.constant 0 : index
    %8 = vector.load %arg2[%c104, %c0_10] : memref<600x128xf32, #tpu.memory_space<vmem>>, vector<1x32xf32>
    %cst_11 = arith.constant dense<0.000000e+00> : vector<4x32xf32>
    %9 = tpu.matmul %0, %2, %cst_11 {dimension_numbers = #tpu.dot_dimension_numbers<[1], [0], [0], [1], [0, 0, 1, 1], [], []>} : vector<4x32xf32>, vector<32x32xf32>, vector<4x32xf32> -> vector<4x32xf32>
    %10 = vector.extract_strided_slice %9 {offsets = [0, 0], sizes = [2, 32], strides = [1, 1]} : vector<4x32xf32> to vector<2x32xf32>
    %c0_12 = arith.constant 0 : index
    %c32_13 = arith.constant 32 : index
    %11 = vector.load %arg3[%c0_12, %c32_13] : memref<2x128xf32, #tpu.memory_space<vmem>>, vector<2x32xf32>
    tpu.vector_store %arg3[%c0_12, %c32_13], %10 {strides = array<i32>} : memref<2x128xf32, #tpu.memory_space<vmem>>, vector<2x32xf32>,
    %cst_14 = arith.constant 0.000000e+00 : f32
    %12 = vector.broadcast %cst_14 : f32 to vector<32x32xf32>
    %13 = arith.maximumf %2, %12 : vector<32x32xf32>
    %cst_15 = arith.constant dense<0.000000e+00> : vector<32x32xf32>
    %14 = tpu.matmul %3, %13, %cst_15 {dimension_numbers = #tpu.dot_dimension_numbers<[1], [0], [0], [1], [0, 0, 1, 1], [], []>} : vector<32x32xf32>, vector<32x32xf32>, vector<32x32xf32> -> vector<32x32xf32>
    %15 = arith.addf %2, %14 : vector<32x32xf32>
    %cst_16 = arith.constant dense<0.000000e+00> : vector<32x64xf32>
    %16 = tpu.matmul %15, %5, %cst_16 {dimension_numbers = #tpu.dot_dimension_numbers<[1], [0], [0], [1], [0, 0, 1, 1], [], []>} : vector<32x32xf32>, vector<32x64xf32>, vector<32x64xf32> -> vector<32x64xf32>
    %17 = vector.broadcast %6 : vector<1x64xf32> to vector<32x64xf32>
    %18 = arith.addf %16, %17 : vector<32x64xf32>
    %cst_17 = arith.constant 0.000000e+00 : f32
    %19 = vector.broadcast %cst_17 : f32 to vector<32x64xf32>
    %20 = arith.maximumf %18, %19 : vector<32x64xf32>
    %cst_18 = arith.constant dense<0.000000e+00> : vector<32x32xf32>
    %21 = tpu.matmul %20, %7, %cst_18 {dimension_numbers = #tpu.dot_dimension_numbers<[1], [0], [0], [1], [0, 0, 1, 1], [], []>} : vector<32x64xf32>, vector<64x32xf32>, vector<32x32xf32> -> vector<32x32xf32>
    %22 = vector.broadcast %8 : vector<1x32xf32> to vector<32x32xf32>
    %23 = arith.addf %21, %22 : vector<32x32xf32>
    %cst_19 = arith.constant 0.000000e+00 : f32
    %24 = vector.broadcast %cst_19 : f32 to vector<32x32xf32>
    %25 = arith.maximumf %23, %24 : vector<32x32xf32>
    %c336 = arith.constant 336 : index
    %c0_20 = arith.constant 0 : index
    %26 = vector.load %arg2[%c336, %c0_20] : memref<600x128xf32, #tpu.memory_space<vmem>>, vector<32x64xf32>
    %c368 = arith.constant 368 : index
    %c0_21 = arith.constant 0 : index
    %27 = vector.load %arg2[%c368, %c0_21] : memref<600x128xf32, #tpu.memory_space<vmem>>, vector<1x64xf32>
    %c376 = arith.constant 376 : index
    %c0_22 = arith.constant 0 : index
    %28 = vector.load %arg2[%c376, %c0_22] : memref<600x128xf32, #tpu.memory_space<vmem>>, vector<64x32xf32>
    %c440 = arith.constant 440 : index
    %c0_23 = arith.constant 0 : index
    %29 = vector.load %arg2[%c440, %c0_23] : memref<600x128xf32, #tpu.memory_space<vmem>>, vector<1x32xf32>
    %30 = vector.extract_strided_slice %9 {offsets = [2, 0], sizes = [2, 32], strides = [1, 1]} : vector<4x32xf32> to vector<2x32xf32>
    %31 = arith.addf %30, %4 : vector<2x32xf32>
    %cst_24 = arith.constant dense<0.000000e+00> : vector<2x64xf32>
    %32 = tpu.matmul %31, %26, %cst_24 {dimension_numbers = #tpu.dot_dimension_numbers<[1], [0], [0], [1], [0, 0, 1, 1], [], []>} : vector<2x32xf32>, vector<32x64xf32>, vector<2x64xf32> -> vector<2x64xf32>
    %33 = vector.broadcast %27 : vector<1x64xf32> to vector<2x64xf32>
    %34 = arith.addf %32, %33 : vector<2x64xf32>
    %cst_25 = arith.constant 0.000000e+00 : f32
    %35 = vector.broadcast %cst_25 : f32 to vector<2x64xf32>
    %36 = arith.maximumf %34, %35 : vector<2x64xf32>
    %cst_26 = arith.constant dense<0.000000e+00> : vector<2x32xf32>
    %37 = tpu.matmul %36, %28, %cst_26 {dimension_numbers = #tpu.dot_dimension_numbers<[1], [0], [0], [1], [0, 0, 1, 1], [], []>} : vector<2x64xf32>, vector<64x32xf32>, vector<2x32xf32> -> vector<2x32xf32>
    %38 = vector.broadcast %29 : vector<1x32xf32> to vector<2x32xf32>
    %39 = arith.addf %37, %38 : vector<2x32xf32>
    %cst_27 = arith.constant 0.000000e+00 : f32
    %40 = vector.broadcast %cst_27 : f32 to vector<2x32xf32>
    %41 = arith.maximumf %39, %40 : vector<2x32xf32>
    %c112 = arith.constant 112 : index
    %c0_28 = arith.constant 0 : index
    %42 = vector.load %arg2[%c112, %c0_28] : memref<600x128xf32, #tpu.memory_space<vmem>>, vector<32x64xf32>
    %c144 = arith.constant 144 : index
    %c0_29 = arith.constant 0 : index
    %43 = vector.load %arg2[%c144, %c0_29] : memref<600x128xf32, #tpu.memory_space<vmem>>, vector<1x64xf32>
    %c152 = arith.constant 152 : index
    %c0_30 = arith.constant 0 : index
    %44 = vector.load %arg2[%c152, %c0_30] : memref<600x128xf32, #tpu.memory_space<vmem>>, vector<64x32xf32>
    %c216 = arith.constant 216 : index
    %c0_31 = arith.constant 0 : index
    %45 = vector.load %arg2[%c216, %c0_31] : memref<600x128xf32, #tpu.memory_space<vmem>>, vector<1x32xf32>
    %46 = vector.extract_strided_slice %1 {offsets = [0, 0], sizes = [32, 1], strides = [1, 1]} : vector<32x2xf32> to vector<32x1xf32>
    %47 = vector.extract_strided_slice %41 {offsets = [0, 0], sizes = [1, 32], strides = [1, 1]} : vector<2x32xf32> to vector<1x32xf32>
    %48 = vector.broadcast %46 : vector<32x1xf32> to vector<32x32xf32>
    %49 = vector.broadcast %47 : vector<1x32xf32> to vector<32x32xf32>
    %50 = arith.mulf %48, %49 : vector<32x32xf32>
    %51 = vector.extract_strided_slice %1 {offsets = [0, 1], sizes = [32, 1], strides = [1, 1]} : vector<32x2xf32> to vector<32x1xf32>
    %52 = vector.extract_strided_slice %41 {offsets = [1, 0], sizes = [1, 32], strides = [1, 1]} : vector<2x32xf32> to vector<1x32xf32>
    %53 = vector.broadcast %51 : vector<32x1xf32> to vector<32x32xf32>
    %54 = vector.broadcast %52 : vector<1x32xf32> to vector<32x32xf32>
    %55 = arith.mulf %53, %54 : vector<32x32xf32>
    %56 = arith.addf %50, %55 : vector<32x32xf32>
    %57 = arith.addf %25, %56 : vector<32x32xf32>
    %cst_32 = arith.constant dense<0.000000e+00> : vector<4x32xf32>
    %58 = tpu.matmul %0, %57, %cst_32 {dimension_numbers = #tpu.dot_dimension_numbers<[1], [0], [0], [1], [0, 0, 1, 1], [], []>} : vector<4x32xf32>, vector<32x32xf32>, vector<4x32xf32> -> vector<4x32xf32>
    %59 = vector.extract_strided_slice %58 {offsets = [0, 0], sizes = [2, 32], strides = [1, 1]} : vector<4x32xf32> to vector<2x32xf32>
    %c0_33 = arith.constant 0 : index
    %c64 = arith.constant 64 : index
    %60 = vector.load %arg3[%c0_33, %c64] : memref<2x128xf32, #tpu.memory_space<vmem>>, vector<2x32xf32>
    tpu.vector_store %arg3[%c0_33, %c64], %59 {strides = array<i32>} : memref<2x128xf32, #tpu.memory_space<vmem>>, vector<2x32xf32>,
    %cst_34 = arith.constant 0.000000e+00 : f32
    %61 = vector.broadcast %cst_34 : f32 to vector<32x32xf32>
    %62 = arith.maximumf %57, %61 : vector<32x32xf32>
    %cst_35 = arith.constant dense<0.000000e+00> : vector<32x32xf32>
    %63 = tpu.matmul %3, %62, %cst_35 {dimension_numbers = #tpu.dot_dimension_numbers<[1], [0], [0], [1], [0, 0, 1, 1], [], []>} : vector<32x32xf32>, vector<32x32xf32>, vector<32x32xf32> -> vector<32x32xf32>
    %64 = arith.addf %57, %63 : vector<32x32xf32>
    %cst_36 = arith.constant dense<0.000000e+00> : vector<32x64xf32>
    %65 = tpu.matmul %64, %42, %cst_36 {dimension_numbers = #tpu.dot_dimension_numbers<[1], [0], [0], [1], [0, 0, 1, 1], [], []>} : vector<32x32xf32>, vector<32x64xf32>, vector<32x64xf32> -> vector<32x64xf32>
    %66 = vector.broadcast %43 : vector<1x64xf32> to vector<32x64xf32>
    %67 = arith.addf %65, %66 : vector<32x64xf32>
    %cst_37 = arith.constant 0.000000e+00 : f32
    %68 = vector.broadcast %cst_37 : f32 to vector<32x64xf32>
    %69 = arith.maximumf %67, %68 : vector<32x64xf32>
    %cst_38 = arith.constant dense<0.000000e+00> : vector<32x32xf32>
    %70 = tpu.matmul %69, %44, %cst_38 {dimension_numbers = #tpu.dot_dimension_numbers<[1], [0], [0], [1], [0, 0, 1, 1], [], []>} : vector<32x64xf32>, vector<64x32xf32>, vector<32x32xf32> -> vector<32x32xf32>
    %71 = vector.broadcast %45 : vector<1x32xf32> to vector<32x32xf32>
    %72 = arith.addf %70, %71 : vector<32x32xf32>
    %cst_39 = arith.constant 0.000000e+00 : f32
    %73 = vector.broadcast %cst_39 : f32 to vector<32x32xf32>
    %74 = arith.maximumf %72, %73 : vector<32x32xf32>
    %c448 = arith.constant 448 : index
    %c0_40 = arith.constant 0 : index
    %75 = vector.load %arg2[%c448, %c0_40] : memref<600x128xf32, #tpu.memory_space<vmem>>, vector<32x64xf32>
    %c480 = arith.constant 480 : index
    %c0_41 = arith.constant 0 : index
    %76 = vector.load %arg2[%c480, %c0_41] : memref<600x128xf32, #tpu.memory_space<vmem>>, vector<1x64xf32>
    %c488 = arith.constant 488 : index
    %c0_42 = arith.constant 0 : index
    %77 = vector.load %arg2[%c488, %c0_42] : memref<600x128xf32, #tpu.memory_space<vmem>>, vector<64x32xf32>
    %c552 = arith.constant 552 : index
    %c0_43 = arith.constant 0 : index
    %78 = vector.load %arg2[%c552, %c0_43] : memref<600x128xf32, #tpu.memory_space<vmem>>, vector<1x32xf32>
    %79 = vector.extract_strided_slice %58 {offsets = [2, 0], sizes = [2, 32], strides = [1, 1]} : vector<4x32xf32> to vector<2x32xf32>
    %80 = arith.addf %79, %41 : vector<2x32xf32>
    %cst_44 = arith.constant dense<0.000000e+00> : vector<2x64xf32>
    %81 = tpu.matmul %80, %75, %cst_44 {dimension_numbers = #tpu.dot_dimension_numbers<[1], [0], [0], [1], [0, 0, 1, 1], [], []>} : vector<2x32xf32>, vector<32x64xf32>, vector<2x64xf32> -> vector<2x64xf32>
    %82 = vector.broadcast %76 : vector<1x64xf32> to vector<2x64xf32>
    %83 = arith.addf %81, %82 : vector<2x64xf32>
    %cst_45 = arith.constant 0.000000e+00 : f32
    %84 = vector.broadcast %cst_45 : f32 to vector<2x64xf32>
    %85 = arith.maximumf %83, %84 : vector<2x64xf32>
    %cst_46 = arith.constant dense<0.000000e+00> : vector<2x32xf32>
    %86 = tpu.matmul %85, %77, %cst_46 {dimension_numbers = #tpu.dot_dimension_numbers<[1], [0], [0], [1], [0, 0, 1, 1], [], []>} : vector<2x64xf32>, vector<64x32xf32>, vector<2x32xf32> -> vector<2x32xf32>
    %87 = vector.broadcast %78 : vector<1x32xf32> to vector<2x32xf32>
    %88 = arith.addf %86, %87 : vector<2x32xf32>
    %cst_47 = arith.constant 0.000000e+00 : f32
    %89 = vector.broadcast %cst_47 : f32 to vector<2x32xf32>
    %90 = arith.maximumf %88, %89 : vector<2x32xf32>
    %c224 = arith.constant 224 : index
    %c0_48 = arith.constant 0 : index
    %91 = vector.load %arg2[%c224, %c0_48] : memref<600x128xf32, #tpu.memory_space<vmem>>, vector<32x64xf32>
    %c256 = arith.constant 256 : index
    %c0_49 = arith.constant 0 : index
    %92 = vector.load %arg2[%c256, %c0_49] : memref<600x128xf32, #tpu.memory_space<vmem>>, vector<1x64xf32>
    %c264 = arith.constant 264 : index
    %c0_50 = arith.constant 0 : index
    %93 = vector.load %arg2[%c264, %c0_50] : memref<600x128xf32, #tpu.memory_space<vmem>>, vector<64x32xf32>
    %c328 = arith.constant 328 : index
    %c0_51 = arith.constant 0 : index
    %94 = vector.load %arg2[%c328, %c0_51] : memref<600x128xf32, #tpu.memory_space<vmem>>, vector<1x32xf32>
    %95 = vector.extract_strided_slice %1 {offsets = [0, 0], sizes = [32, 1], strides = [1, 1]} : vector<32x2xf32> to vector<32x1xf32>
    %96 = vector.extract_strided_slice %90 {offsets = [0, 0], sizes = [1, 32], strides = [1, 1]} : vector<2x32xf32> to vector<1x32xf32>
    %97 = vector.broadcast %95 : vector<32x1xf32> to vector<32x32xf32>
    %98 = vector.broadcast %96 : vector<1x32xf32> to vector<32x32xf32>
    %99 = arith.mulf %97, %98 : vector<32x32xf32>
    %100 = vector.extract_strided_slice %1 {offsets = [0, 1], sizes = [32, 1], strides = [1, 1]} : vector<32x2xf32> to vector<32x1xf32>
    %101 = vector.extract_strided_slice %90 {offsets = [1, 0], sizes = [1, 32], strides = [1, 1]} : vector<2x32xf32> to vector<1x32xf32>
    %102 = vector.broadcast %100 : vector<32x1xf32> to vector<32x32xf32>
    %103 = vector.broadcast %101 : vector<1x32xf32> to vector<32x32xf32>
    %104 = arith.mulf %102, %103 : vector<32x32xf32>
    %105 = arith.addf %99, %104 : vector<32x32xf32>
    %106 = arith.addf %74, %105 : vector<32x32xf32>
    %cst_52 = arith.constant dense<0.000000e+00> : vector<4x32xf32>
    %107 = tpu.matmul %0, %106, %cst_52 {dimension_numbers = #tpu.dot_dimension_numbers<[1], [0], [0], [1], [0, 0, 1, 1], [], []>} : vector<4x32xf32>, vector<32x32xf32>, vector<4x32xf32> -> vector<4x32xf32>
    %108 = vector.extract_strided_slice %107 {offsets = [0, 0], sizes = [2, 32], strides = [1, 1]} : vector<4x32xf32> to vector<2x32xf32>
    %c0_53 = arith.constant 0 : index
    %c96 = arith.constant 96 : index
    %109 = vector.load %arg3[%c0_53, %c96] : memref<2x128xf32, #tpu.memory_space<vmem>>, vector<2x32xf32>
    tpu.vector_store %arg3[%c0_53, %c96], %108 {strides = array<i32>} : memref<2x128xf32, #tpu.memory_space<vmem>>, vector<2x32xf32>,
    %cst_54 = arith.constant 0.000000e+00 : f32
    %110 = vector.broadcast %cst_54 : f32 to vector<32x32xf32>
    %111 = arith.maximumf %106, %110 : vector<32x32xf32>
    %cst_55 = arith.constant dense<0.000000e+00> : vector<32x32xf32>
    %112 = tpu.matmul %3, %111, %cst_55 {dimension_numbers = #tpu.dot_dimension_numbers<[1], [0], [0], [1], [0, 0, 1, 1], [], []>} : vector<32x32xf32>, vector<32x32xf32>, vector<32x32xf32> -> vector<32x32xf32>
    %113 = arith.addf %106, %112 : vector<32x32xf32>
    %cst_56 = arith.constant dense<0.000000e+00> : vector<32x64xf32>
    %114 = tpu.matmul %113, %91, %cst_56 {dimension_numbers = #tpu.dot_dimension_numbers<[1], [0], [0], [1], [0, 0, 1, 1], [], []>} : vector<32x32xf32>, vector<32x64xf32>, vector<32x64xf32> -> vector<32x64xf32>
    %115 = vector.broadcast %92 : vector<1x64xf32> to vector<32x64xf32>
    %116 = arith.addf %114, %115 : vector<32x64xf32>
    %cst_57 = arith.constant 0.000000e+00 : f32
    %117 = vector.broadcast %cst_57 : f32 to vector<32x64xf32>
    %118 = arith.maximumf %116, %117 : vector<32x64xf32>
    %cst_58 = arith.constant dense<0.000000e+00> : vector<32x32xf32>
    %119 = tpu.matmul %118, %93, %cst_58 {dimension_numbers = #tpu.dot_dimension_numbers<[1], [0], [0], [1], [0, 0, 1, 1], [], []>} : vector<32x64xf32>, vector<64x32xf32>, vector<32x32xf32> -> vector<32x32xf32>
    %120 = vector.broadcast %94 : vector<1x32xf32> to vector<32x32xf32>
    %121 = arith.addf %119, %120 : vector<32x32xf32>
    %122 = vector.extract_strided_slice %0 {offsets = [0, 0], sizes = [2, 32], strides = [1, 1]} : vector<4x32xf32> to vector<2x32xf32>
    %cst_59 = arith.constant dense<0.000000e+00> : vector<2x32xf32>
    %123 = tpu.matmul %122, %121, %cst_59 {dimension_numbers = #tpu.dot_dimension_numbers<[1], [0], [0], [1], [0, 0, 1, 1], [], []>} : vector<2x32xf32>, vector<32x32xf32>, vector<2x32xf32> -> vector<2x32xf32>
    %c0_60 = arith.constant 0 : index
    %c0_61 = arith.constant 0 : index
    %124 = vector.load %arg3[%c0_60, %c0_61] : memref<2x128xf32, #tpu.memory_space<vmem>>, vector<2x32xf32>
    tpu.vector_store %arg3[%c0_60, %c0_61], %123 {strides = array<i32>} : memref<2x128xf32, #tpu.memory_space<vmem>>, vector<2x32xf32>,
    %c560 = arith.constant 560 : index
    %c0_62 = arith.constant 0 : index
    %125 = vector.load %arg2[%c560, %c0_62] : memref<600x128xf32, #tpu.memory_space<vmem>>, vector<32x128xf32>
    %c592 = arith.constant 592 : index
    %c0_63 = arith.constant 0 : index
    %126 = vector.load %arg2[%c592, %c0_63] : memref<600x128xf32, #tpu.memory_space<vmem>>, vector<1x128xf32>
    %cst_64 = arith.constant dense<0.000000e+00> : vector<2x128xf32>
    %127 = tpu.matmul %123, %125, %cst_64 {dimension_numbers = #tpu.dot_dimension_numbers<[1], [0], [0], [1], [0, 0, 1, 1], [], []>} : vector<2x32xf32>, vector<32x128xf32>, vector<2x128xf32> -> vector<2x128xf32>
    %128 = vector.broadcast %126 : vector<1x128xf32> to vector<2x128xf32>
    %129 = arith.addf %127, %128 : vector<2x128xf32>
    %c0_65 = arith.constant 0 : index
    %c0_66 = arith.constant 0 : index
    %130 = vector.load %arg4[%c0_65, %c0_66] : memref<2x128xf32, #tpu.memory_space<vmem>>, vector<2x128xf32>
    tpu.vector_store %arg4[%c0_65, %c0_66], %129 {strides = array<i32>} : memref<2x128xf32, #tpu.memory_space<vmem>>, vector<2x128xf32>,
    return
  }
}

</mosaic_0001>

<llo_original>
// kernel: tpu_custom_call.1
$region0: #{tpu_custom_call.1}
  #allocation0 [shape = 'u32[]', space=smem, size = 0x4, offset = 0x4, fixed_abs, tag = 'smem constant byte address 0x4 - core index']
  #allocation1 [shape = 'u32[144,128]{1,0:T(1,128)}', space=vmem, size = 0x12000, scoped, tag = 'internal scratch']
  %s0 = inlined_call_operand.hbm [shape: f32[72,128], index: 0, kind: input, shape index: {}]
  %s1 = inlined_call_operand.hbm [shape: f32[32,32], index: 1, kind: input, shape index: {}]
  %s2 = inlined_call_operand.hbm [shape: f32[600,128], index: 2, kind: input, shape index: {}]
  %s3 = inlined_call_operand.hbm [shape: f32[2,128], index: 3, kind: output, shape index: {0}]
  %s4 = inlined_call_operand.hbm [shape: f32[2,128], index: 4, kind: output, shape index: {1}]
  %5 = xla_tuple %s3, %s4
  %s6 = sld [smem:[#allocation0]]
  $region42: #{tpu_custom_call.1} parent=0
    _
  %s8 = ssub.s32 1, %s6
  %s9 = scalar_select 0, %s8, %s6
  $region1: #{tpu_custom_call.1} parent=0
    #allocation2 [shape = 'u8[36864]{0}', space=vmem, size = 0x9000, scoped, tag = 'input window, operand 0, single buffered']
    #allocation3 [shape = 's32[1]{0}', space=sflag, size = 0x4, scoped, tag = 'scoped memory for tpu_custom_call.1']
    #allocation4 [shape = 's32[1]{0}', space=sflag, size = 0x4, scoped, tag = 'scoped memory for tpu_custom_call.1']
    #allocation5 [shape = 'u8[16384]{0}', space=vmem, size = 0x4000, scoped, tag = 'input window, operand 1, single buffered']
    #allocation6 [shape = 's32[1]{0}', space=sflag, size = 0x4, scoped, tag = 'scoped memory for tpu_custom_call.1']
    #allocation7 [shape = 'u8[307200]{0}', space=vmem, size = 0x4b000, scoped, tag = 'input window, operand 2, single buffered']
    #allocation8 [shape = 'u8[1024]{0}', space=vmem, size = 0x400, scoped, tag = 'output window, operand 0, single buffered']
    #allocation9 [shape = 'u8[1024]{0}', space=vmem, size = 0x400, scoped, tag = 'output window, operand 1, single buffered']
    #allocation10 [shape = 's32[1]{0}', space=sflag, size = 0x4, scoped, tag = 'scoped memory for tpu_custom_call.1']
    %10 = vsyncpa [#allocation3], 0
    %11 = vsyncpa [#allocation6], 0
    %12 = vsyncpa [#allocation4], 0
    %13 = vsyncpa [#allocation10], 0
    // Predicated region
    $region2: #{tpu_custom_call.1} parent=1 // pred_check
      _
    $region3: #{tpu_custom_call.1} parent=1 // pred_check_branch
      %15 = sbr.rel (0) target = $region5
    $region4: #{tpu_custom_call.1} parent=1 // pred_region
      %s17 = ssub.s32 1152, 1152
      %18 = vsyncadd [#allocation3], %s17
      %s19 = sshll.u32 [#allocation2], 4
      %s20 = int_to_ptr.vmem [resolvable:$true] %s19
      %25 = dma.hbm_to_vmem [thread:$0]  %s0, 1152, %s20, [#allocation3], 128, 128, 8
    $region5: #{tpu_custom_call.1} parent=1 // pred_fallthru
      _
    // Predicated region
    $region6: #{tpu_custom_call.1} parent=1 // pred_check
      _
    $region7: #{tpu_custom_call.1} parent=1 // pred_check_branch
      %27 = sbr.rel (0) target = $region9
    $region8: #{tpu_custom_call.1} parent=1 // pred_region
      %s29 = ssub.s32 512, 512
      %30 = vsyncadd [#allocation6], %s29
      %s31 = sshll.u32 [#allocation5], 4
      %s32 = int_to_ptr.vmem [resolvable:$true] %s31
      %37 = dma.hbm_to_vmem [thread:$0]  %s1, 512, %s32, [#allocation6], 128, 128, 8
    $region9: #{tpu_custom_call.1} parent=1 // pred_fallthru
      _
    // Predicated region
    $region10: #{tpu_custom_call.1} parent=1 // pred_check
      _
    $region11: #{tpu_custom_call.1} parent=1 // pred_check_branch
      %39 = sbr.rel (0) target = $region13
    $region12: #{tpu_custom_call.1} parent=1 // pred_region
      %s41 = ssub.s32 9600, 9600
      %42 = vsyncadd [#allocation6], %s41
      %s43 = sshll.u32 [#allocation7], 4
      %s44 = int_to_ptr.vmem [resolvable:$true] %s43
      %49 = dma.hbm_to_vmem [thread:$0]  %s2, 9600, %s44, [#allocation6], 128, 128, 8
    $region13: #{tpu_custom_call.1} parent=1 // pred_fallthru
      _
    // Predicated region
    $region14: #{tpu_custom_call.1} parent=1 // pred_check
      _
    $region15: #{tpu_custom_call.1} parent=1 // pred_check_branch
      %51 = sbr.rel (0) target = $region17
    $region16: #{tpu_custom_call.1} parent=1 // pred_region
      %52 = dma.done [#allocation3], 1152
    $region17: #{tpu_custom_call.1} parent=1 // pred_fallthru
      _
    // Predicated region
    $region18: #{tpu_custom_call.1} parent=1 // pred_check
      _
    $region19: #{tpu_custom_call.1} parent=1 // pred_check_branch
      %54 = sbr.rel (0) target = $region21
    $region20: #{tpu_custom_call.1} parent=1 // pred_region
      %55 = dma.done [#allocation6], 512
    $region21: #{tpu_custom_call.1} parent=1 // pred_fallthru
      _
    // Predicated region
    $region22: #{tpu_custom_call.1} parent=1 // pred_check
      _
    $region23: #{tpu_custom_call.1} parent=1 // pred_check_branch
      %57 = sbr.rel (0) target = $region25
    $region24: #{tpu_custom_call.1} parent=1 // pred_region
      %58 = dma.done [#allocation6], 9600
    $region25: #{tpu_custom_call.1} parent=1 // pred_fallthru
      _
    %v59 = vld [vmem:[#allocation2] sm:$0xf]
    %v60 = vld [vmem:[#allocation2 + $0x8] sm:$0xff]
    %v61 = vld [vmem:[#allocation2 + $0x10] sm:$0xff]
    %v62 = vld [vmem:[#allocation2 + $0x18] sm:$0xff]
    %v63 = vld [vmem:[#allocation2 + $0x20] sm:$0xff]
    %v64 = vld [vmem:[#allocation2 + $0x28] sm:$0xff]
    %v65 = vld [vmem:[#allocation2 + $0x30] sm:$0xff]
    %v66 = vld [vmem:[#allocation2 + $0x38] sm:$0xff]
    %v67 = vld [vmem:[#allocation2 + $0x40] sm:$0xff]
    %v68 = vld [vmem:[#allocation5] sm:$0xff]
    %v69 = vld [vmem:[#allocation5 + $0x8] sm:$0xff]
    %v70 = vld [vmem:[#allocation5 + $0x10] sm:$0xff]
    %v71 = vld [vmem:[#allocation5 + $0x18] sm:$0xff]
    %v72 = vld [vmem:[#allocation7] sm:$0xff]
    %v73 = vld [vmem:[#allocation7 + $0x8] sm:$0xff]
    %v74 = vld [vmem:[#allocation7 + $0x10] sm:$0xff]
    %v75 = vld [vmem:[#allocation7 + $0x18] sm:$0xff]
    %v76 = vld [vmem:[#allocation7 + $0x20] sm:$0x1]
    %v77 = vld [vmem:[#allocation7 + $0x28] sm:$0xff]
    %v78 = vld [vmem:[#allocation7 + $0x30] sm:$0xff]
    %v79 = vld [vmem:[#allocation7 + $0x38] sm:$0xff]
    %v80 = vld [vmem:[#allocation7 + $0x40] sm:$0xff]
    %v81 = vld [vmem:[#allocation7 + $0x48] sm:$0xff]
    %v82 = vld [vmem:[#allocation7 + $0x50] sm:$0xff]
    %v83 = vld [vmem:[#allocation7 + $0x58] sm:$0xff]
    %v84 = vld [vmem:[#allocation7 + $0x60] sm:$0xff]
    %v85 = vld [vmem:[#allocation7 + $0x68] sm:$0x1]
    %vm86 = vcmask 261120
    %v88 = vsel %vm86, %v59, 0
    %90 = vmatprep.subr.mxu0 0.0
    %91 = vmatpush1.msra.mxu0 %v64
    %92 = vmatprep.subr.mxu0 0.0
    %93 = vmatpush1.msra.mxu0 %v65
    %94 = vmatprep.subr.mxu0 0.0
    %95 = vmatpush1.msra.mxu0 %v66
    %96 = vmatprep.subr.mxu0 0.0
    %97 = vmatpush1.msra.mxu0 %v67
    %98 = vmatprep.subr.mxu0 0.0
    %99 = vmatpush1.msra.mxu0 0.0
    %100 = vmatprep.subr.mxu0 0.0
    %101 = vmatpush1.msra.mxu0 0.0
    %102 = vmatprep.subr.mxu0 0.0
    %103 = vmatpush1.msra.mxu0 0.0
    %104 = vmatprep.subr.mxu0 0.0
    %105 = vmatpush1.msra.mxu0 0.0
    %106 = vmatprep.subr.mxu0 0.0
    %107 = vmatpush1.msra.mxu0 0.0
    %108 = vmatprep.subr.mxu0 0.0
    %109 = vmatpush1.msra.mxu0 0.0
    %110 = vmatprep.subr.mxu0 0.0
    %111 = vmatpush1.msra.mxu0 0.0
    %112 = vmatprep.subr.mxu0 0.0
    %113 = vmatpush1.msra.mxu0 0.0
    %114 = vmatprep.subr.mxu0 0.0
    %115 = vmatpush1.msra.mxu0 0.0
    %116 = vmatprep.subr.mxu0 0.0
    %117 = vmatpush1.msra.mxu0 0.0
    %118 = vmatprep.subr.mxu0 0.0
    %119 = vmatpush1.msra.mxu0 0.0
    %120 = vmatprep.subr.mxu0 0.0
    %121 = vmatpush1.msra.mxu0 0.0
    %122 = vmatprep.subr.mxu0 0.0
    %123 = vmatpush1.msra.mxu0 0.0
    %124 = vmatprep.subr.mxu0 0.0
    %125 = vmatpush1.msra.mxu0 0.0
    %126 = vmatprep.subr.mxu0 0.0
    %127 = vmatpush1.msra.mxu0 0.0
    %128 = vmatprep.subr.mxu0 0.0
    %129 = vmatpush1.msra.mxu0 0.0
    %130 = vmatprep.subr.mxu0 0.0
    %131 = vmatpush1.msra.mxu0 0.0
    %132 = vmatprep.subr.mxu0 0.0
    %133 = vmatpush1.msra.mxu0 0.0
    %134 = vmatprep.subr.mxu0 0.0
    %135 = vmatpush1.msra.mxu0 0.0
    %136 = vmatprep.subr.mxu0 0.0
    %137 = vmatpush1.msra.mxu0 0.0
    %138 = vmatprep.subr.mxu0 0.0
    %139 = vmatpush1.msra.mxu0 0.0
    %140 = vmatprep.subr.mxu0 0.0
    %141 = vmatpush1.msra.mxu0 0.0
    %142 = vmatprep.subr.mxu0 0.0
    %143 = vmatpush1.msra.mxu0 0.0
    %144 = vmatprep.subr.mxu0 0.0
    %145 = vmatpush1.msra.mxu0 0.0
    %146 = vmatprep.subr.mxu0 0.0
    %147 = vmatpush1.msra.mxu0 0.0
    %148 = vmatprep.subr.mxu0 0.0
    %149 = vmatpush1.msra.mxu0 0.0
    %150 = vmatprep.subr.mxu0 0.0
    %151 = vmatpush1.msra.mxu0 0.0
    %152 = vmatprep.subr.mxu0 0.0
    %153 = vmatpush1.msra.mxu0 0.0
    %154 = vmatprep.mubr.f32.mxu0 0.0
    %155 = vmatmul.mubr.f32.gmra.mrb[0].mxu0 %v88
    %v156 = vpop.f32.mrb[0].mxu0
    %v157 = vadd.f32 0.0, %v156
    %v158 = vpop.f32.mrb[0].mxu0
    %159 = vdwg.mxu0
    %161 = vrot.lane.b32.xlu0 %v157, 32
    %v162 = vpop.permute.xlu0 %161
    %vm164 = vcmask 517376
    %165 = vst.msk [vmem:[#allocation8] sm:$0x3] %vm164, %v162
    %v166 = vmax.f32 %v64, 0.0
    %v167 = vmax.f32 %v65, 0.0
    %v168 = vmax.f32 %v66, 0.0
    %v169 = vmax.f32 %v67, 0.0
    %v171 = vsel %vm86, %v68, 0
    %v174 = vsel %vm86, %v69, 0
    %v177 = vsel %vm86, %v70, 0
    %v180 = vsel %vm86, %v71, 0
    %182 = vmatprep.subr.mxu0 0.0
    %183 = vmatpush1.msra.mxu0 %v166
    %184 = vmatprep.subr.mxu0 0.0
    %185 = vmatpush1.msra.mxu0 %v167
    %186 = vmatprep.subr.mxu0 0.0
    %187 = vmatpush1.msra.mxu0 %v168
    %188 = vmatprep.subr.mxu0 0.0
    %189 = vmatpush1.msra.mxu0 %v169
    %190 = vmatprep.subr.mxu0 0.0
    %191 = vmatpush1.msra.mxu0 0.0
    %192 = vmatprep.subr.mxu0 0.0
    %193 = vmatpush1.msra.mxu0 0.0
    %194 = vmatprep.subr.mxu0 0.0
    %195 = vmatpush1.msra.mxu0 0.0
    %196 = vmatprep.subr.mxu0 0.0
    %197 = vmatpush1.msra.mxu0 0.0
    %198 = vmatprep.subr.mxu0 0.0
    %199 = vmatpush1.msra.mxu0 0.0
    %200 = vmatprep.subr.mxu0 0.0
    %201 = vmatpush1.msra.mxu0 0.0
    %202 = vmatprep.subr.mxu0 0.0
    %203 = vmatpush1.msra.mxu0 0.0
    %204 = vmatprep.subr.mxu0 0.0
    %205 = vmatpush1.msra.mxu0 0.0
    %206 = vmatprep.subr.mxu0 0.0
    %207 = vmatpush1.msra.mxu0 0.0
    %208 = vmatprep.subr.mxu0 0.0
    %209 = vmatpush1.msra.mxu0 0.0
    %210 = vmatprep.subr.mxu0 0.0
    %211 = vmatpush1.msra.mxu0 0.0
    %212 = vmatprep.subr.mxu0 0.0
    %213 = vmatpush1.msra.mxu0 0.0
    %214 = vmatprep.subr.mxu0 0.0
    %215 = vmatpush1.msra.mxu0 0.0
    %216 = vmatprep.subr.mxu0 0.0
    %217 = vmatpush1.msra.mxu0 0.0
    %218 = vmatprep.subr.mxu0 0.0
    %219 = vmatpush1.msra.mxu0 0.0
    %220 = vmatprep.subr.mxu0 0.0
    %221 = vmatpush1.msra.mxu0 0.0
    %222 = vmatprep.subr.mxu0 0.0
    %223 = vmatpush1.msra.mxu0 0.0
    %224 = vmatprep.subr.mxu0 0.0
    %225 = vmatpush1.msra.mxu0 0.0
    %226 = vmatprep.subr.mxu0 0.0
    %227 = vmatpush1.msra.mxu0 0.0
    %228 = vmatprep.subr.mxu0 0.0
    %229 = vmatpush1.msra.mxu0 0.0
    %230 = vmatprep.subr.mxu0 0.0
    %231 = vmatpush1.msra.mxu0 0.0
    %232 = vmatprep.subr.mxu0 0.0
    %233 = vmatpush1.msra.mxu0 0.0
    %234 = vmatprep.subr.mxu0 0.0
    %235 = vmatpush1.msra.mxu0 0.0
    %236 = vmatprep.subr.mxu0 0.0
    %237 = vmatpush1.msra.mxu0 0.0
    %238 = vmatprep.subr.mxu0 0.0
    %239 = vmatpush1.msra.mxu0 0.0
    %240 = vmatprep.subr.mxu0 0.0
    %241 = vmatpush1.msra.mxu0 0.0
    %242 = vmatprep.subr.mxu0 0.0
    %243 = vmatpush1.msra.mxu0 0.0
    %244 = vmatprep.subr.mxu0 0.0
    %245 = vmatpush1.msra.mxu0 0.0
    %246 = vmatprep.mubr.f32.mxu0 0.0
    %247 = vmatmul.mubr.f32.gmra.mrb[0].mxu0 %v171
    %v248 = vpop.f32.mrb[0].mxu0
    %v249 = vadd.f32 0.0, %v248
    %v250 = vpop.f32.mrb[0].mxu0
    %251 = vmatprep.mubr.f32.mxu0 0.0
    %252 = vmatmul.mubr.f32.gmra.mrb[0].mxu0 %v174
    %v253 = vpop.f32.mrb[0].mxu0
    %v254 = vadd.f32 0.0, %v253
    %v255 = vpop.f32.mrb[0].mxu0
    %256 = vmatprep.mubr.f32.mxu0 0.0
    %257 = vmatmul.mubr.f32.gmra.mrb[0].mxu0 %v177
    %v258 = vpop.f32.mrb[0].mxu0
    %v259 = vadd.f32 0.0, %v258
    %v260 = vpop.f32.mrb[0].mxu0
    %261 = vmatprep.mubr.f32.mxu0 0.0
    %262 = vmatmul.mubr.f32.gmra.mrb[0].mxu0 %v180
    %v263 = vpop.f32.mrb[0].mxu0
    %v264 = vadd.f32 0.0, %v263
    %v265 = vpop.f32.mrb[0].mxu0
    %266 = vdwg.mxu0
    %v267 = vadd.f32 %v64, %v249
    %v268 = vadd.f32 %v65, %v254
    %v269 = vadd.f32 %v66, %v259
    %v270 = vadd.f32 %v67, %v264
    %v271 = vlaneseq
    %v272 = vshrl.u32 %v271, 7
    %v273 = vsub.s32 0, %v272
    %v274 = vrot.slane %v76, %v273
    %v276 = vsel %vm86, %v267, 0
    %v279 = vsel %vm86, %v268, 0
    %v282 = vsel %vm86, %v269, 0
    %v285 = vsel %vm86, %v270, 0
    %287 = vmatprep.subr.mxu0 0.0
    %288 = vmatpush1.msra.mxu0 %v72
    %289 = vmatprep.subr.mxu0 0.0
    %290 = vmatpush1.msra.mxu0 %v73
    %291 = vmatprep.subr.mxu0 0.0
    %292 = vmatpush1.msra.mxu0 %v74
    %293 = vmatprep.subr.mxu0 0.0
    %294 = vmatpush1.msra.mxu0 %v75
    %295 = vmatprep.subr.mxu0 0.0
    %296 = vmatpush1.msra.mxu0 0.0
    %297 = vmatprep.subr.mxu0 0.0
    %298 = vmatpush1.msra.mxu0 0.0
    %299 = vmatprep.subr.mxu0 0.0
    %300 = vmatpush1.msra.mxu0 0.0
    %301 = vmatprep.subr.mxu0 0.0
    %302 = vmatpush1.msra.mxu0 0.0
    %303 = vmatprep.subr.mxu0 0.0
    %304 = vmatpush1.msra.mxu0 0.0
    %305 = vmatprep.subr.mxu0 0.0
    %306 = vmatpush1.msra.mxu0 0.0
    %307 = vmatprep.subr.mxu0 0.0
    %308 = vmatpush1.msra.mxu0 0.0
    %309 = vmatprep.subr.mxu0 0.0
    %310 = vmatpush1.msra.mxu0 0.0
    %311 = vmatprep.subr.mxu0 0.0
    %312 = vmatpush1.msra.mxu0 0.0
    %313 = vmatprep.subr.mxu0 0.0
    %314 = vmatpush1.msra.mxu0 0.0
    %315 = vmatprep.subr.mxu0 0.0
    %316 = vmatpush1.msra.mxu0 0.0
    %317 = vmatprep.subr.mxu0 0.0
    %318 = vmatpush1.msra.mxu0 0.0
    %319 = vmatprep.subr.mxu0 0.0
    %320 = vmatpush1.msra.mxu0 0.0
    %321 = vmatprep.subr.mxu0 0.0
    %322 = vmatpush1.msra.mxu0 0.0
    %323 = vmatprep.subr.mxu0 0.0
    %324 = vmatpush1.msra.mxu0 0.0
    %325 = vmatprep.subr.mxu0 0.0
    %326 = vmatpush1.msra.mxu0 0.0
    %327 = vmatprep.subr.mxu0 0.0
    %328 = vmatpush1.msra.mxu0 0.0
    %329 = vmatprep.subr.mxu0 0.0
    %330 = vmatpush1.msra.mxu0 0.0
    %331 = vmatprep.subr.mxu0 0.0
    %332 = vmatpush1.msra.mxu0 0.0
    %333 = vmatprep.subr.mxu0 0.0
    %334 = vmatpush1.msra.mxu0 0.0
    %335 = vmatprep.subr.mxu0 0.0
    %336 = vmatpush1.msra.mxu0 0.0
    %337 = vmatprep.subr.mxu0 0.0
    %338 = vmatpush1.msra.mxu0 0.0
    %339 = vmatprep.subr.mxu0 0.0
    %340 = vmatpush1.msra.mxu0 0.0
    %341 = vmatprep.subr.mxu0 0.0
    %342 = vmatpush1.msra.mxu0 0.0
    %343 = vmatprep.subr.mxu0 0.0
    %344 = vmatpush1.msra.mxu0 0.0
    %345 = vmatprep.subr.mxu0 0.0
    %346 = vmatpush1.msra.mxu0 0.0
    %347 = vmatprep.subr.mxu0 0.0
    %348 = vmatpush1.msra.mxu0 0.0
    %349 = vmatprep.subr.mxu0 0.0
    %350 = vmatpush1.msra.mxu0 0.0
    %351 = vmatprep.mubr.f32.mxu0 0.0
    %352 = vmatmul.mubr.f32.gmra.mrb[0].mxu0 %v276
    %v353 = vpop.f32.mrb[0].mxu0
    %v354 = vadd.f32 %v274, %v353
    %v355 = vpop.f32.mrb[0].mxu0
    %356 = vmatprep.mubr.f32.mxu0 0.0
    %357 = vmatmul.mubr.f32.gmra.mrb[0].mxu0 %v279
    %v358 = vpop.f32.mrb[0].mxu0
    %v359 = vadd.f32 %v274, %v358
    %v360 = vpop.f32.mrb[0].mxu0
    %361 = vmatprep.mubr.f32.mxu0 0.0
    %362 = vmatmul.mubr.f32.gmra.mrb[0].mxu0 %v282
    %v363 = vpop.f32.mrb[0].mxu0
    %v364 = vadd.f32 %v274, %v363
    %v365 = vpop.f32.mrb[0].mxu0
    %366 = vmatprep.mubr.f32.mxu0 0.0
    %367 = vmatmul.mubr.f32.gmra.mrb[0].mxu0 %v285
    %v368 = vpop.f32.mrb[0].mxu0
    %v369 = vadd.f32 %v274, %v368
    %v370 = vpop.f32.mrb[0].mxu0
    %371 = vdwg.mxu0
    %v372 = vmax.f32 %v354, 0.0
    %v373 = vmax.f32 %v359, 0.0
    %v374 = vmax.f32 %v364, 0.0
    %v375 = vmax.f32 %v369, 0.0
    %v376 = vlaneseq
    %v377 = vshrl.u32 %v376, 7
    %v378 = vsub.s32 0, %v377
    %v379 = vrot.slane %v85, %v378
    %vm380 = vcmask 523264
    %v382 = vsel %vm380, %v372, 0
    %v385 = vsel %vm380, %v373, 0
    %v388 = vsel %vm380, %v374, 0
    %v391 = vsel %vm380, %v375, 0
    %393 = vmatprep.subr.mxu0 0.0
    %394 = vmatpush1.msra.mxu0 %v77
    %395 = vmatprep.subr.mxu0 0.0
    %396 = vmatpush1.msra.mxu0 %v78
    %397 = vmatprep.subr.mxu0 0.0
    %398 = vmatpush1.msra.mxu0 %v79
    %399 = vmatprep.subr.mxu0 0.0
    %400 = vmatpush1.msra.mxu0 %v80
    %401 = vmatprep.subr.mxu0 0.0
    %402 = vmatpush1.msra.mxu0 %v81
    %403 = vmatprep.subr.mxu0 0.0
    %404 = vmatpush1.msra.mxu0 %v82
    %405 = vmatprep.subr.mxu0 0.0
    %406 = vmatpush1.msra.mxu0 %v83
    %407 = vmatprep.subr.mxu0 0.0
    %408 = vmatpush1.msra.mxu0 %v84
    %409 = vmatprep.subr.mxu0 0.0
    %410 = vmatpush1.msra.mxu0 0.0
    %411 = vmatprep.subr.mxu0 0.0
    %412 = vmatpush1.msra.mxu0 0.0
    %413 = vmatprep.subr.mxu0 0.0
    %414 = vmatpush1.msra.mxu0 0.0
    %415 = vmatprep.subr.mxu0 0.0
    %416 = vmatpush1.msra.mxu0 0.0
    %417 = vmatprep.subr.mxu0 0.0
    %418 = vmatpush1.msra.mxu0 0.0
    %419 = vmatprep.subr.mxu0 0.0
    %420 = vmatpush1.msra.mxu0 0.0
    %421 = vmatprep.subr.mxu0 0.0
    %422 = vmatpush1.msra.mxu0 0.0
    %423 = vmatprep.subr.mxu0 0.0
    %424 = vmatpush1.msra.mxu0 0.0
    %425 = vmatprep.subr.mxu0 0.0
    %426 = vmatpush1.msra.mxu0 0.0
    %427 = vmatprep.subr.mxu0 0.0
    %428 = vmatpush1.msra.mxu0 0.0
    %429 = vmatprep.subr.mxu0 0.0
    %430 = vmatpush1.msra.mxu0 0.0
    %431 = vmatprep.subr.mxu0 0.0
    %432 = vmatpush1.msra.mxu0 0.0
    %433 = vmatprep.subr.mxu0 0.0
    %434 = vmatpush1.msra.mxu0 0.0
    %435 = vmatprep.subr.mxu0 0.0
    %436 = vmatpush1.msra.mxu0 0.0
    %437 = vmatprep.subr.mxu0 0.0
    %438 = vmatpush1.msra.mxu0 0.0
    %439 = vmatprep.subr.mxu0 0.0
    %440 = vmatpush1.msra.mxu0 0.0
    %441 = vmatprep.subr.mxu0 0.0
    %442 = vmatpush1.msra.mxu0 0.0
    %443 = vmatprep.subr.mxu0 0.0
    %444 = vmatpush1.msra.mxu0 0.0
    %445 = vmatprep.subr.mxu0 0.0
    %446 = vmatpush1.msra.mxu0 0.0
    %447 = vmatprep.subr.mxu0 0.0
    %448 = vmatpush1.msra.mxu0 0.0
    %449 = vmatprep.subr.mxu0 0.0
    %450 = vmatpush1.msra.mxu0 0.0
    %451 = vmatprep.subr.mxu0 0.0
    %452 = vmatpush1.msra.mxu0 0.0
    %453 = vmatprep.subr.mxu0 0.0
    %454 = vmatpush1.msra.mxu0 0.0
    %455 = vmatprep.subr.mxu0 0.0
    %456 = vmatpush1.msra.mxu0 0.0
    %457 = vmatprep.mubr.f32.mxu0 0.0
    %458 = vmatmul.mubr.f32.gmra.mrb[0].mxu0 %v382
    %v459 = vpop.f32.mrb[0].mxu0
    %v460 = vadd.f32 %v379, %v459
    %v461 = vpop.f32.mrb[0].mxu0
    %462 = vmatprep.mubr.f32.mxu0 0.0
    %463 = vmatmul.mubr.f32.gmra.mrb[0].mxu0 %v385
    %v464 = vpop.f32.mrb[0].mxu0
    %v465 = vadd.f32 %v379, %v464
    %v466 = vpop.f32.mrb[0].mxu0
    %467 = vmatprep.mubr.f32.mxu0 0.0
    %468 = vmatmul.mubr.f32.gmra.mrb[0].mxu0 %v388
    %v469 = vpop.f32.mrb[0].mxu0
    %v470 = vadd.f32 %v379, %v469
    %v471 = vpop.f32.mrb[0].mxu0
    %472 = vmatprep.mubr.f32.mxu0 0.0
    %473 = vmatmul.mubr.f32.gmra.mrb[0].mxu0 %v391
    %v474 = vpop.f32.mrb[0].mxu0
    %v475 = vadd.f32 %v379, %v474
    %v476 = vpop.f32.mrb[0].mxu0
    %477 = vdwg.mxu0
    %v478 = vmax.f32 %v460, 0.0
    %v479 = vmax.f32 %v465, 0.0
    %v480 = vmax.f32 %v470, 0.0
    %v481 = vmax.f32 %v475, 0.0
    %v482 = vld [vmem:[#allocation7 + $0x150] sm:$0xff]
    %v483 = vld [vmem:[#allocation7 + $0x158] sm:$0xff]
    %v484 = vld [vmem:[#allocation7 + $0x160] sm:$0xff]
    %v485 = vld [vmem:[#allocation7 + $0x168] sm:$0xff]
    %v486 = vld [vmem:[#allocation7 + $0x170] sm:$0x1]
    %v487 = vld [vmem:[#allocation7 + $0x178] sm:$0xff]
    %v488 = vld [vmem:[#allocation7 + $0x180] sm:$0xff]
    %v489 = vld [vmem:[#allocation7 + $0x188] sm:$0xff]
    %v490 = vld [vmem:[#allocation7 + $0x190] sm:$0xff]
    %v491 = vld [vmem:[#allocation7 + $0x198] sm:$0xff]
    %v492 = vld [vmem:[#allocation7 + $0x1a0] sm:$0xff]
    %v493 = vld [vmem:[#allocation7 + $0x1a8] sm:$0xff]
    %v494 = vld [vmem:[#allocation7 + $0x1b0] sm:$0xff]
    %v495 = vld [vmem:[#allocation7 + $0x1b8] sm:$0x1]
    %v496 = vadd.f32 %v157, 0.0
    %v497 = vlaneseq
    %v498 = vshrl.u32 %v497, 7
    %v499 = vsub.s32 0, %v498
    %v500 = vrot.slane %v486, %v499
    %v502 = vrot.slane %v496, 2
    %v503 = vsel %vm86, %v502, 0
    %505 = vmatprep.subr.mxu0 0.0
    %506 = vmatpush1.msra.mxu0 %v482
    %507 = vmatprep.subr.mxu0 0.0
    %508 = vmatpush1.msra.mxu0 %v483
    %509 = vmatprep.subr.mxu0 0.0
    %510 = vmatpush1.msra.mxu0 %v484
    %511 = vmatprep.subr.mxu0 0.0
    %512 = vmatpush1.msra.mxu0 %v485
    %513 = vmatprep.subr.mxu0 0.0
    %514 = vmatpush1.msra.mxu0 0.0
    %515 = vmatprep.subr.mxu0 0.0
    %516 = vmatpush1.msra.mxu0 0.0
    %517 = vmatprep.subr.mxu0 0.0
    %518 = vmatpush1.msra.mxu0 0.0
    %519 = vmatprep.subr.mxu0 0.0
    %520 = vmatpush1.msra.mxu0 0.0
    %521 = vmatprep.subr.mxu0 0.0
    %522 = vmatpush1.msra.mxu0 0.0
    %523 = vmatprep.subr.mxu0 0.0
    %524 = vmatpush1.msra.mxu0 0.0
    %525 = vmatprep.subr.mxu0 0.0
    %526 = vmatpush1.msra.mxu0 0.0
    %527 = vmatprep.subr.mxu0 0.0
    %528 = vmatpush1.msra.mxu0 0.0
    %529 = vmatprep.subr.mxu0 0.0
    %530 = vmatpush1.msra.mxu0 0.0
    %531 = vmatprep.subr.mxu0 0.0
    %532 = vmatpush1.msra.mxu0 0.0
    %533 = vmatprep.subr.mxu0 0.0
    %534 = vmatpush1.msra.mxu0 0.0
    %535 = vmatprep.subr.mxu0 0.0
    %536 = vmatpush1.msra.mxu0 0.0
    %537 = vmatprep.subr.mxu0 0.0
    %538 = vmatpush1.msra.mxu0 0.0
    %539 = vmatprep.subr.mxu0 0.0
    %540 = vmatpush1.msra.mxu0 0.0
    %541 = vmatprep.subr.mxu0 0.0
    %542 = vmatpush1.msra.mxu0 0.0
    %543 = vmatprep.subr.mxu0 0.0
    %544 = vmatpush1.msra.mxu0 0.0
    %545 = vmatprep.subr.mxu0 0.0
    %546 = vmatpush1.msra.mxu0 0.0
    %547 = vmatprep.subr.mxu0 0.0
    %548 = vmatpush1.msra.mxu0 0.0
    %549 = vmatprep.subr.mxu0 0.0
    %550 = vmatpush1.msra.mxu0 0.0
    %551 = vmatprep.subr.mxu0 0.0
    %552 = vmatpush1.msra.mxu0 0.0
    %553 = vmatprep.subr.mxu0 0.0
    %554 = vmatpush1.msra.mxu0 0.0
    %555 = vmatprep.subr.mxu0 0.0
    %556 = vmatpush1.msra.mxu0 0.0
    %557 = vmatprep.subr.mxu0 0.0
    %558 = vmatpush1.msra.mxu0 0.0
    %559 = vmatprep.subr.mxu0 0.0
    %560 = vmatpush1.msra.mxu0 0.0
    %561 = vmatprep.subr.mxu0 0.0
    %562 = vmatpush1.msra.mxu0 0.0
    %563 = vmatprep.subr.mxu0 0.0
    %564 = vmatpush1.msra.mxu0 0.0
    %565 = vmatprep.subr.mxu0 0.0
    %566 = vmatpush1.msra.mxu0 0.0
    %567 = vmatprep.subr.mxu0 0.0
    %568 = vmatpush1.msra.mxu0 0.0
    %569 = vmatprep.mubr.f32.mxu0 0.0
    %570 = vmatmul.mubr.f32.gmra.mrb[0].mxu0 %v503
    %v571 = vpop.f32.mrb[0].mxu0
    %v572 = vadd.f32 %v500, %v571
    %v573 = vpop.f32.mrb[0].mxu0
    %574 = vdwg.mxu0
    %v575 = vmax.f32 %v572, 0.0
    %v576 = vlaneseq
    %v577 = vshrl.u32 %v576, 7
    %v578 = vsub.s32 0, %v577
    %v579 = vrot.slane %v495, %v578
    %v581 = vsel %vm380, %v575, 0
    %583 = vmatprep.subr.mxu0 0.0
    %584 = vmatpush1.msra.mxu0 %v487
    %585 = vmatprep.subr.mxu0 0.0
    %586 = vmatpush1.msra.mxu0 %v488
    %587 = vmatprep.subr.mxu0 0.0
    %588 = vmatpush1.msra.mxu0 %v489
    %589 = vmatprep.subr.mxu0 0.0
    %590 = vmatpush1.msra.mxu0 %v490
    %591 = vmatprep.subr.mxu0 0.0
    %592 = vmatpush1.msra.mxu0 %v491
    %593 = vmatprep.subr.mxu0 0.0
    %594 = vmatpush1.msra.mxu0 %v492
    %595 = vmatprep.subr.mxu0 0.0
    %596 = vmatpush1.msra.mxu0 %v493
    %597 = vmatprep.subr.mxu0 0.0
    %598 = vmatpush1.msra.mxu0 %v494
    %599 = vmatprep.subr.mxu0 0.0
    %600 = vmatpush1.msra.mxu0 0.0
    %601 = vmatprep.subr.mxu0 0.0
    %602 = vmatpush1.msra.mxu0 0.0
    %603 = vmatprep.subr.mxu0 0.0
    %604 = vmatpush1.msra.mxu0 0.0
    %605 = vmatprep.subr.mxu0 0.0
    %606 = vmatpush1.msra.mxu0 0.0
    %607 = vmatprep.subr.mxu0 0.0
    %608 = vmatpush1.msra.mxu0 0.0
    %609 = vmatprep.subr.mxu0 0.0
    %610 = vmatpush1.msra.mxu0 0.0
    %611 = vmatprep.subr.mxu0 0.0
    %612 = vmatpush1.msra.mxu0 0.0
    %613 = vmatprep.subr.mxu0 0.0
    %614 = vmatpush1.msra.mxu0 0.0
    %615 = vmatprep.subr.mxu0 0.0
    %616 = vmatpush1.msra.mxu0 0.0
    %617 = vmatprep.subr.mxu0 0.0
    %618 = vmatpush1.msra.mxu0 0.0
    %619 = vmatprep.subr.mxu0 0.0
    %620 = vmatpush1.msra.mxu0 0.0
    %621 = vmatprep.subr.mxu0 0.0
    %622 = vmatpush1.msra.mxu0 0.0
    %623 = vmatprep.subr.mxu0 0.0
    %624 = vmatpush1.msra.mxu0 0.0
    %625 = vmatprep.subr.mxu0 0.0
    %626 = vmatpush1.msra.mxu0 0.0
    %627 = vmatprep.subr.mxu0 0.0
    %628 = vmatpush1.msra.mxu0 0.0
    %629 = vmatprep.subr.mxu0 0.0
    %630 = vmatpush1.msra.mxu0 0.0
    %631 = vmatprep.subr.mxu0 0.0
    %632 = vmatpush1.msra.mxu0 0.0
    %633 = vmatprep.subr.mxu0 0.0
    %634 = vmatpush1.msra.mxu0 0.0
    %635 = vmatprep.subr.mxu0 0.0
    %636 = vmatpush1.msra.mxu0 0.0
    %637 = vmatprep.subr.mxu0 0.0
    %638 = vmatpush1.msra.mxu0 0.0
    %639 = vmatprep.subr.mxu0 0.0
    %640 = vmatpush1.msra.mxu0 0.0
    %641 = vmatprep.subr.mxu0 0.0
    %642 = vmatpush1.msra.mxu0 0.0
    %643 = vmatprep.subr.mxu0 0.0
    %644 = vmatpush1.msra.mxu0 0.0
    %645 = vmatprep.subr.mxu0 0.0
    %646 = vmatpush1.msra.mxu0 0.0
    %647 = vmatprep.mubr.f32.mxu0 0.0
    %648 = vmatmul.mubr.f32.gmra.mrb[0].mxu0 %v581
    %v649 = vpop.f32.mrb[0].mxu0
    %v650 = vadd.f32 %v579, %v649
    %v651 = vpop.f32.mrb[0].mxu0
    %652 = vdwg.mxu0
    %v653 = vmax.f32 %v650, 0.0
    %v654 = vld [vmem:[#allocation7 + $0x70] sm:$0xff]
    %v655 = vld [vmem:[#allocation7 + $0x78] sm:$0xff]
    %v656 = vld [vmem:[#allocation7 + $0x80] sm:$0xff]
    %v657 = vld [vmem:[#allocation7 + $0x88] sm:$0xff]
    %v658 = vld [vmem:[#allocation7 + $0x90] sm:$0x1]
    %v659 = vld [vmem:[#allocation7 + $0x98] sm:$0xff]
    %v660 = vld [vmem:[#allocation7 + $0xa0] sm:$0xff]
    %v661 = vld [vmem:[#allocation7 + $0xa8] sm:$0xff]
    %v662 = vld [vmem:[#allocation7 + $0xb0] sm:$0xff]
    %v663 = vld [vmem:[#allocation7 + $0xb8] sm:$0xff]
    %v664 = vld [vmem:[#allocation7 + $0xc0] sm:$0xff]
    %v665 = vld [vmem:[#allocation7 + $0xc8] sm:$0xff]
    %v666 = vld [vmem:[#allocation7 + $0xd0] sm:$0xff]
    %v667 = vld [vmem:[#allocation7 + $0xd8] sm:$0x1]
    %669 = vset.pattern.permute.xlu0 0
    %670 = vperm.xlu0 %669, %v60
    %v671 = vpop.permute.xlu0 %670
    %674 = vset.pattern.permute.xlu0 0
    %675 = vperm.xlu0 %674, %v61
    %v676 = vpop.permute.xlu0 %675
    %679 = vset.pattern.permute.xlu0 0
    %680 = vperm.xlu0 %679, %v62
    %v681 = vpop.permute.xlu0 %680
    %684 = vset.pattern.permute.xlu0 0
    %685 = vperm.xlu0 %684, %v63
    %v686 = vpop.permute.xlu0 %685
    %v688 = vlaneseq
    %v689 = vshrl.u32 %v688, 7
    %v690 = vsub.s32 0, %v689
    %v691 = vrot.slane %v653, %v690
    %v692 = vmul.f32 %v671, %v691
    %v693 = vmul.f32 %v676, %v691
    %v694 = vmul.f32 %v681, %v691
    %v695 = vmul.f32 %v686, %v691
    %696 = vset.pattern.permute.xlu0 1
    %697 = vperm.xlu0 %696, %v60
    %v698 = vpop.permute.xlu0 %697
    %700 = vset.pattern.permute.xlu0 1
    %701 = vperm.xlu0 %700, %v61
    %v702 = vpop.permute.xlu0 %701
    %704 = vset.pattern.permute.xlu0 1
    %705 = vperm.xlu0 %704, %v62
    %v706 = vpop.permute.xlu0 %705
    %708 = vset.pattern.permute.xlu0 1
    %709 = vperm.xlu0 %708, %v63
    %v710 = vpop.permute.xlu0 %709
    %v712 = vlaneseq
    %v713 = vshrl.u32 %v712, 7
    %v714 = vsub.s32 1, %v713
    %v715 = vrot.slane %v653, %v714
    %v716 = vmul.f32 %v698, %v715
    %v717 = vmul.f32 %v702, %v715
    %v718 = vmul.f32 %v706, %v715
    %v719 = vmul.f32 %v710, %v715
    %v720 = vadd.f32 %v692, %v716
    %v721 = vadd.f32 %v693, %v717
    %v722 = vadd.f32 %v694, %v718
    %v723 = vadd.f32 %v695, %v719
    %v724 = vadd.f32 %v478, %v720
    %v725 = vadd.f32 %v479, %v721
    %v726 = vadd.f32 %v480, %v722
    %v727 = vadd.f32 %v481, %v723
    %728 = vmatprep.subr.mxu0 0.0
    %729 = vmatpush1.msra.mxu0 %v724
    %730 = vmatprep.subr.mxu0 0.0
    %731 = vmatpush1.msra.mxu0 %v725
    %732 = vmatprep.subr.mxu0 0.0
    %733 = vmatpush1.msra.mxu0 %v726
    %734 = vmatprep.subr.mxu0 0.0
    %735 = vmatpush1.msra.mxu0 %v727
    %736 = vmatprep.subr.mxu0 0.0
    %737 = vmatpush1.msra.mxu0 0.0
    %738 = vmatprep.subr.mxu0 0.0
    %739 = vmatpush1.msra.mxu0 0.0
    %740 = vmatprep.subr.mxu0 0.0
    %741 = vmatpush1.msra.mxu0 0.0
    %742 = vmatprep.subr.mxu0 0.0
    %743 = vmatpush1.msra.mxu0 0.0
    %744 = vmatprep.subr.mxu0 0.0
    %745 = vmatpush1.msra.mxu0 0.0
    %746 = vmatprep.subr.mxu0 0.0
    %747 = vmatpush1.msra.mxu0 0.0
    %748 = vmatprep.subr.mxu0 0.0
    %749 = vmatpush1.msra.mxu0 0.0
    %750 = vmatprep.subr.mxu0 0.0
    %751 = vmatpush1.msra.mxu0 0.0
    %752 = vmatprep.subr.mxu0 0.0
    %753 = vmatpush1.msra.mxu0 0.0
    %754 = vmatprep.subr.mxu0 0.0
    %755 = vmatpush1.msra.mxu0 0.0
    %756 = vmatprep.subr.mxu0 0.0
    %757 = vmatpush1.msra.mxu0 0.0
    %758 = vmatprep.subr.mxu0 0.0
    %759 = vmatpush1.msra.mxu0 0.0
    %760 = vmatprep.subr.mxu0 0.0
    %761 = vmatpush1.msra.mxu0 0.0
    %762 = vmatprep.subr.mxu0 0.0
    %763 = vmatpush1.msra.mxu0 0.0
    %764 = vmatprep.subr.mxu0 0.0
    %765 = vmatpush1.msra.mxu0 0.0
    %766 = vmatprep.subr.mxu0 0.0
    %767 = vmatpush1.msra.mxu0 0.0
    %768 = vmatprep.subr.mxu0 0.0
    %769 = vmatpush1.msra.mxu0 0.0
    %770 = vmatprep.subr.mxu0 0.0
    %771 = vmatpush1.msra.mxu0 0.0
    %772 = vmatprep.subr.mxu0 0.0
    %773 = vmatpush1.msra.mxu0 0.0
    %774 = vmatprep.subr.mxu0 0.0
    %775 = vmatpush1.msra.mxu0 0.0
    %776 = vmatprep.subr.mxu0 0.0
    %777 = vmatpush1.msra.mxu0 0.0
    %778 = vmatprep.subr.mxu0 0.0
    %779 = vmatpush1.msra.mxu0 0.0
    %780 = vmatprep.subr.mxu0 0.0
    %781 = vmatpush1.msra.mxu0 0.0
    %782 = vmatprep.subr.mxu0 0.0
    %783 = vmatpush1.msra.mxu0 0.0
    %784 = vmatprep.subr.mxu0 0.0
    %785 = vmatpush1.msra.mxu0 0.0
    %786 = vmatprep.subr.mxu0 0.0
    %787 = vmatpush1.msra.mxu0 0.0
    %788 = vmatprep.subr.mxu0 0.0
    %789 = vmatpush1.msra.mxu0 0.0
    %790 = vmatprep.subr.mxu0 0.0
    %791 = vmatpush1.msra.mxu0 0.0
    %792 = vmatprep.mubr.f32.mxu0 0.0
    %793 = vmatmul.mubr.f32.gmra.mrb[0].mxu0 %v88
    %v794 = vpop.f32.mrb[0].mxu0
    %v795 = vadd.f32 0.0, %v794
    %v796 = vpop.f32.mrb[0].mxu0
    %797 = vdwg.mxu0
    %799 = vrot.lane.b32.xlu0 %v795, 64
    %v800 = vpop.permute.xlu0 %799
    %vm802 = vcmask 779776
    %803 = vst.msk [vmem:[#allocation8] sm:$0x3] %vm802, %v800
    %v804 = vmax.f32 %v724, 0.0
    %v805 = vmax.f32 %v725, 0.0
    %v806 = vmax.f32 %v726, 0.0
    %v807 = vmax.f32 %v727, 0.0
    %808 = vmatprep.subr.mxu0 0.0
    %809 = vmatpush1.msra.mxu0 %v804
    %810 = vmatprep.subr.mxu0 0.0
    %811 = vmatpush1.msra.mxu0 %v805
    %812 = vmatprep.subr.mxu0 0.0
    %813 = vmatpush1.msra.mxu0 %v806
    %814 = vmatprep.subr.mxu0 0.0
    %815 = vmatpush1.msra.mxu0 %v807
    %816 = vmatprep.subr.mxu0 0.0
    %817 = vmatpush1.msra.mxu0 0.0
    %818 = vmatprep.subr.mxu0 0.0
    %819 = vmatpush1.msra.mxu0 0.0
    %820 = vmatprep.subr.mxu0 0.0
    %821 = vmatpush1.msra.mxu0 0.0
    %822 = vmatprep.subr.mxu0 0.0
    %823 = vmatpush1.msra.mxu0 0.0
    %824 = vmatprep.subr.mxu0 0.0
    %825 = vmatpush1.msra.mxu0 0.0
    %826 = vmatprep.subr.mxu0 0.0
    %827 = vmatpush1.msra.mxu0 0.0
    %828 = vmatprep.subr.mxu0 0.0
    %829 = vmatpush1.msra.mxu0 0.0
    %830 = vmatprep.subr.mxu0 0.0
    %831 = vmatpush1.msra.mxu0 0.0
    %832 = vmatprep.subr.mxu0 0.0
    %833 = vmatpush1.msra.mxu0 0.0
    %834 = vmatprep.subr.mxu0 0.0
    %835 = vmatpush1.msra.mxu0 0.0
    %836 = vmatprep.subr.mxu0 0.0
    %837 = vmatpush1.msra.mxu0 0.0
    %838 = vmatprep.subr.mxu0 0.0
    %839 = vmatpush1.msra.mxu0 0.0
    %840 = vmatprep.subr.mxu0 0.0
    %841 = vmatpush1.msra.mxu0 0.0
    %842 = vmatprep.subr.mxu0 0.0
    %843 = vmatpush1.msra.mxu0 0.0
    %844 = vmatprep.subr.mxu0 0.0
    %845 = vmatpush1.msra.mxu0 0.0
    %846 = vmatprep.subr.mxu0 0.0
    %847 = vmatpush1.msra.mxu0 0.0
    %848 = vmatprep.subr.mxu0 0.0
    %849 = vmatpush1.msra.mxu0 0.0
    %850 = vmatprep.subr.mxu0 0.0
    %851 = vmatpush1.msra.mxu0 0.0
    %852 = vmatprep.subr.mxu0 0.0
    %853 = vmatpush1.msra.mxu0 0.0
    %854 = vmatprep.subr.mxu0 0.0
    %855 = vmatpush1.msra.mxu0 0.0
    %856 = vmatprep.subr.mxu0 0.0
    %857 = vmatpush1.msra.mxu0 0.0
    %858 = vmatprep.subr.mxu0 0.0
    %859 = vmatpush1.msra.mxu0 0.0
    %860 = vmatprep.subr.mxu0 0.0
    %861 = vmatpush1.msra.mxu0 0.0
    %862 = vmatprep.subr.mxu0 0.0
    %863 = vmatpush1.msra.mxu0 0.0
    %864 = vmatprep.subr.mxu0 0.0
    %865 = vmatpush1.msra.mxu0 0.0
    %866 = vmatprep.subr.mxu0 0.0
    %867 = vmatpush1.msra.mxu0 0.0
    %868 = vmatprep.subr.mxu0 0.0
    %869 = vmatpush1.msra.mxu0 0.0
    %870 = vmatprep.subr.mxu0 0.0
    %871 = vmatpush1.msra.mxu0 0.0
    %872 = vmatprep.mubr.f32.mxu0 0.0
    %873 = vmatmul.mubr.f32.gmra.mrb[0].mxu0 %v171
    %v874 = vpop.f32.mrb[0].mxu0
    %v875 = vadd.f32 0.0, %v874
    %v876 = vpop.f32.mrb[0].mxu0
    %877 = vmatprep.mubr.f32.mxu0 0.0
    %878 = vmatmul.mubr.f32.gmra.mrb[0].mxu0 %v174
    %v879 = vpop.f32.mrb[0].mxu0
    %v880 = vadd.f32 0.0, %v879
    %v881 = vpop.f32.mrb[0].mxu0
    %882 = vmatprep.mubr.f32.mxu0 0.0
    %883 = vmatmul.mubr.f32.gmra.mrb[0].mxu0 %v177
    %v884 = vpop.f32.mrb[0].mxu0
    %v885 = vadd.f32 0.0, %v884
    %v886 = vpop.f32.mrb[0].mxu0
    %887 = vmatprep.mubr.f32.mxu0 0.0
    %888 = vmatmul.mubr.f32.gmra.mrb[0].mxu0 %v180
    %v889 = vpop.f32.mrb[0].mxu0
    %v890 = vadd.f32 0.0, %v889
    %v891 = vpop.f32.mrb[0].mxu0
    %892 = vdwg.mxu0
    %v893 = vadd.f32 %v724, %v875
    %v894 = vadd.f32 %v725, %v880
    %v895 = vadd.f32 %v726, %v885
    %v896 = vadd.f32 %v727, %v890
    %v897 = vlaneseq
    %v898 = vshrl.u32 %v897, 7
    %v899 = vsub.s32 0, %v898
    %v900 = vrot.slane %v658, %v899
    %v902 = vsel %vm86, %v893, 0
    %v905 = vsel %vm86, %v894, 0
    %v908 = vsel %vm86, %v895, 0
    %v911 = vsel %vm86, %v896, 0
    %913 = vmatprep.subr.mxu0 0.0
    %914 = vmatpush1.msra.mxu0 %v654
    %915 = vmatprep.subr.mxu0 0.0
    %916 = vmatpush1.msra.mxu0 %v655
    %917 = vmatprep.subr.mxu0 0.0
    %918 = vmatpush1.msra.mxu0 %v656
    %919 = vmatprep.subr.mxu0 0.0
    %920 = vmatpush1.msra.mxu0 %v657
    %921 = vmatprep.subr.mxu0 0.0
    %922 = vmatpush1.msra.mxu0 0.0
    %923 = vmatprep.subr.mxu0 0.0
    %924 = vmatpush1.msra.mxu0 0.0
    %925 = vmatprep.subr.mxu0 0.0
    %926 = vmatpush1.msra.mxu0 0.0
    %927 = vmatprep.subr.mxu0 0.0
    %928 = vmatpush1.msra.mxu0 0.0
    %929 = vmatprep.subr.mxu0 0.0
    %930 = vmatpush1.msra.mxu0 0.0
    %931 = vmatprep.subr.mxu0 0.0
    %932 = vmatpush1.msra.mxu0 0.0
    %933 = vmatprep.subr.mxu0 0.0
    %934 = vmatpush1.msra.mxu0 0.0
    %935 = vmatprep.subr.mxu0 0.0
    %936 = vmatpush1.msra.mxu0 0.0
    %937 = vmatprep.subr.mxu0 0.0
    %938 = vmatpush1.msra.mxu0 0.0
    %939 = vmatprep.subr.mxu0 0.0
    %940 = vmatpush1.msra.mxu0 0.0
    %941 = vmatprep.subr.mxu0 0.0
    %942 = vmatpush1.msra.mxu0 0.0
    %943 = vmatprep.subr.mxu0 0.0
    %944 = vmatpush1.msra.mxu0 0.0
    %945 = vmatprep.subr.mxu0 0.0
    %946 = vmatpush1.msra.mxu0 0.0
    %947 = vmatprep.subr.mxu0 0.0
    %948 = vmatpush1.msra.mxu0 0.0
    %949 = vmatprep.subr.mxu0 0.0
    %950 = vmatpush1.msra.mxu0 0.0
    %951 = vmatprep.subr.mxu0 0.0
    %952 = vmatpush1.msra.mxu0 0.0
    %953 = vmatprep.subr.mxu0 0.0
    %954 = vmatpush1.msra.mxu0 0.0
    %955 = vmatprep.subr.mxu0 0.0
    %956 = vmatpush1.msra.mxu0 0.0
    %957 = vmatprep.subr.mxu0 0.0
    %958 = vmatpush1.msra.mxu0 0.0
    %959 = vmatprep.subr.mxu0 0.0
    %960 = vmatpush1.msra.mxu0 0.0
    %961 = vmatprep.subr.mxu0 0.0
    %962 = vmatpush1.msra.mxu0 0.0
    %963 = vmatprep.subr.mxu0 0.0
    %964 = vmatpush1.msra.mxu0 0.0
    %965 = vmatprep.subr.mxu0 0.0
    %966 = vmatpush1.msra.mxu0 0.0
    %967 = vmatprep.subr.mxu0 0.0
    %968 = vmatpush1.msra.mxu0 0.0
    %969 = vmatprep.subr.mxu0 0.0
    %970 = vmatpush1.msra.mxu0 0.0
    %971 = vmatprep.subr.mxu0 0.0
    %972 = vmatpush1.msra.mxu0 0.0
    %973 = vmatprep.subr.mxu0 0.0
    %974 = vmatpush1.msra.mxu0 0.0
    %975 = vmatprep.subr.mxu0 0.0
    %976 = vmatpush1.msra.mxu0 0.0
    %977 = vmatprep.mubr.f32.mxu0 0.0
    %978 = vmatmul.mubr.f32.gmra.mrb[0].mxu0 %v902
    %v979 = vpop.f32.mrb[0].mxu0
    %v980 = vadd.f32 %v900, %v979
    %v981 = vpop.f32.mrb[0].mxu0
    %982 = vmatprep.mubr.f32.mxu0 0.0
    %983 = vmatmul.mubr.f32.gmra.mrb[0].mxu0 %v905
    %v984 = vpop.f32.mrb[0].mxu0
    %v985 = vadd.f32 %v900, %v984
    %v986 = vpop.f32.mrb[0].mxu0
    %987 = vmatprep.mubr.f32.mxu0 0.0
    %988 = vmatmul.mubr.f32.gmra.mrb[0].mxu0 %v908
    %v989 = vpop.f32.mrb[0].mxu0
    %v990 = vadd.f32 %v900, %v989
    %v991 = vpop.f32.mrb[0].mxu0
    %992 = vmatprep.mubr.f32.mxu0 0.0
    %993 = vmatmul.mubr.f32.gmra.mrb[0].mxu0 %v911
    %v994 = vpop.f32.mrb[0].mxu0
    %v995 = vadd.f32 %v900, %v994
    %v996 = vpop.f32.mrb[0].mxu0
    %997 = vdwg.mxu0
    %v998 = vmax.f32 %v980, 0.0
    %v999 = vmax.f32 %v985, 0.0
    %v1000 = vmax.f32 %v990, 0.0
    %v1001 = vmax.f32 %v995, 0.0
    %v1002 = vlaneseq
    %v1003 = vshrl.u32 %v1002, 7
    %v1004 = vsub.s32 0, %v1003
    %v1005 = vrot.slane %v667, %v1004
    %v1007 = vsel %vm380, %v998, 0
    %v1010 = vsel %vm380, %v999, 0
    %v1013 = vsel %vm380, %v1000, 0
    %v1016 = vsel %vm380, %v1001, 0
    %1018 = vmatprep.subr.mxu0 0.0
    %1019 = vmatpush1.msra.mxu0 %v659
    %1020 = vmatprep.subr.mxu0 0.0
    %1021 = vmatpush1.msra.mxu0 %v660
    %1022 = vmatprep.subr.mxu0 0.0
    %1023 = vmatpush1.msra.mxu0 %v661
    %1024 = vmatprep.subr.mxu0 0.0
    %1025 = vmatpush1.msra.mxu0 %v662
    %1026 = vmatprep.subr.mxu0 0.0
    %1027 = vmatpush1.msra.mxu0 %v663
    %1028 = vmatprep.subr.mxu0 0.0
    %1029 = vmatpush1.msra.mxu0 %v664
    %1030 = vmatprep.subr.mxu0 0.0
    %1031 = vmatpush1.msra.mxu0 %v665
    %1032 = vmatprep.subr.mxu0 0.0
    %1033 = vmatpush1.msra.mxu0 %v666
    %1034 = vmatprep.subr.mxu0 0.0
    %1035 = vmatpush1.msra.mxu0 0.0
    %1036 = vmatprep.subr.mxu0 0.0
    %1037 = vmatpush1.msra.mxu0 0.0
    %1038 = vmatprep.subr.mxu0 0.0
    %1039 = vmatpush1.msra.mxu0 0.0
    %1040 = vmatprep.subr.mxu0 0.0
    %1041 = vmatpush1.msra.mxu0 0.0
    %1042 = vmatprep.subr.mxu0 0.0
    %1043 = vmatpush1.msra.mxu0 0.0
    %1044 = vmatprep.subr.mxu0 0.0
    %1045 = vmatpush1.msra.mxu0 0.0
    %1046 = vmatprep.subr.mxu0 0.0
    %1047 = vmatpush1.msra.mxu0 0.0
    %1048 = vmatprep.subr.mxu0 0.0
    %1049 = vmatpush1.msra.mxu0 0.0
    %1050 = vmatprep.subr.mxu0 0.0
    %1051 = vmatpush1.msra.mxu0 0.0
    %1052 = vmatprep.subr.mxu0 0.0
    %1053 = vmatpush1.msra.mxu0 0.0
    %1054 = vmatprep.subr.mxu0 0.0
    %1055 = vmatpush1.msra.mxu0 0.0
    %1056 = vmatprep.subr.mxu0 0.0
    %1057 = vmatpush1.msra.mxu0 0.0
    %1058 = vmatprep.subr.mxu0 0.0
    %1059 = vmatpush1.msra.mxu0 0.0
    %1060 = vmatprep.subr.mxu0 0.0
    %1061 = vmatpush1.msra.mxu0 0.0
    %1062 = vmatprep.subr.mxu0 0.0
    %1063 = vmatpush1.msra.mxu0 0.0
    %1064 = vmatprep.subr.mxu0 0.0
    %1065 = vmatpush1.msra.mxu0 0.0
    %1066 = vmatprep.subr.mxu0 0.0
    %1067 = vmatpush1.msra.mxu0 0.0
    %1068 = vmatprep.subr.mxu0 0.0
    %1069 = vmatpush1.msra.mxu0 0.0
    %1070 = vmatprep.subr.mxu0 0.0
    %1071 = vmatpush1.msra.mxu0 0.0
    %1072 = vmatprep.subr.mxu0 0.0
    %1073 = vmatpush1.msra.mxu0 0.0
    %1074 = vmatprep.subr.mxu0 0.0
    %1075 = vmatpush1.msra.mxu0 0.0
    %1076 = vmatprep.subr.mxu0 0.0
    %1077 = vmatpush1.msra.mxu0 0.0
    %1078 = vmatprep.subr.mxu0 0.0
    %1079 = vmatpush1.msra.mxu0 0.0
    %1080 = vmatprep.subr.mxu0 0.0
    %1081 = vmatpush1.msra.mxu0 0.0
    %1082 = vmatprep.mubr.f32.mxu0 0.0
    %1083 = vmatmul.mubr.f32.gmra.mrb[0].mxu0 %v1007
    %v1084 = vpop.f32.mrb[0].mxu0
    %v1085 = vadd.f32 %v1005, %v1084
    %v1086 = vpop.f32.mrb[0].mxu0
    %1087 = vmatprep.mubr.f32.mxu0 0.0
    %1088 = vmatmul.mubr.f32.gmra.mrb[0].mxu0 %v1010
    %v1089 = vpop.f32.mrb[0].mxu0
    %v1090 = vadd.f32 %v1005, %v1089
    %v1091 = vpop.f32.mrb[0].mxu0
    %1092 = vmatprep.mubr.f32.mxu0 0.0
    %1093 = vmatmul.mubr.f32.gmra.mrb[0].mxu0 %v1013
    %v1094 = vpop.f32.mrb[0].mxu0
    %v1095 = vadd.f32 %v1005, %v1094
    %v1096 = vpop.f32.mrb[0].mxu0
    %1097 = vmatprep.mubr.f32.mxu0 0.0
    %1098 = vmatmul.mubr.f32.gmra.mrb[0].mxu0 %v1016
    %v1099 = vpop.f32.mrb[0].mxu0
    %v1100 = vadd.f32 %v1005, %v1099
    %v1101 = vpop.f32.mrb[0].mxu0
    %1102 = vdwg.mxu0
    %v1103 = vmax.f32 %v1085, 0.0
    %v1104 = vmax.f32 %v1090, 0.0
    %v1105 = vmax.f32 %v1095, 0.0
    %v1106 = vmax.f32 %v1100, 0.0
    %v1107 = vld [vmem:[#allocation7 + $0x1c0] sm:$0xff]
    %v1108 = vld [vmem:[#allocation7 + $0x1c8] sm:$0xff]
    %v1109 = vld [vmem:[#allocation7 + $0x1d0] sm:$0xff]
    %v1110 = vld [vmem:[#allocation7 + $0x1d8] sm:$0xff]
    %v1111 = vld [vmem:[#allocation7 + $0x1e0] sm:$0x1]
    %v1112 = vld [vmem:[#allocation7 + $0x1e8] sm:$0xff]
    %v1113 = vld [vmem:[#allocation7 + $0x1f0] sm:$0xff]
    %v1114 = vld [vmem:[#allocation7 + $0x1f8] sm:$0xff]
    %v1115 = vld [vmem:[#allocation7 + $0x200] sm:$0xff]
    %v1116 = vld [vmem:[#allocation7 + $0x208] sm:$0xff]
    %v1117 = vld [vmem:[#allocation7 + $0x210] sm:$0xff]
    %v1118 = vld [vmem:[#allocation7 + $0x218] sm:$0xff]
    %v1119 = vld [vmem:[#allocation7 + $0x220] sm:$0xff]
    %v1120 = vld [vmem:[#allocation7 + $0x228] sm:$0x1]
    %v1122 = vrot.slane %v653, 6
    %v1124 = vadd.f32 %v795, %v1122
    %v1125 = vlaneseq
    %v1126 = vshrl.u32 %v1125, 7
    %v1127 = vsub.s32 0, %v1126
    %v1128 = vrot.slane %v1111, %v1127
    %v1130 = vrot.slane %v1124, 2
    %v1131 = vsel %vm86, %v1130, 0
    %1133 = vmatprep.subr.mxu0 0.0
    %1134 = vmatpush1.msra.mxu0 %v1107
    %1135 = vmatprep.subr.mxu0 0.0
    %1136 = vmatpush1.msra.mxu0 %v1108
    %1137 = vmatprep.subr.mxu0 0.0
    %1138 = vmatpush1.msra.mxu0 %v1109
    %1139 = vmatprep.subr.mxu0 0.0
    %1140 = vmatpush1.msra.mxu0 %v1110
    %1141 = vmatprep.subr.mxu0 0.0
    %1142 = vmatpush1.msra.mxu0 0.0
    %1143 = vmatprep.subr.mxu0 0.0
    %1144 = vmatpush1.msra.mxu0 0.0
    %1145 = vmatprep.subr.mxu0 0.0
    %1146 = vmatpush1.msra.mxu0 0.0
    %1147 = vmatprep.subr.mxu0 0.0
    %1148 = vmatpush1.msra.mxu0 0.0
    %1149 = vmatprep.subr.mxu0 0.0
    %1150 = vmatpush1.msra.mxu0 0.0
    %1151 = vmatprep.subr.mxu0 0.0
    %1152 = vmatpush1.msra.mxu0 0.0
    %1153 = vmatprep.subr.mxu0 0.0
    %1154 = vmatpush1.msra.mxu0 0.0
    %1155 = vmatprep.subr.mxu0 0.0
    %1156 = vmatpush1.msra.mxu0 0.0
    %1157 = vmatprep.subr.mxu0 0.0
    %1158 = vmatpush1.msra.mxu0 0.0
    %1159 = vmatprep.subr.mxu0 0.0
    %1160 = vmatpush1.msra.mxu0 0.0
    %1161 = vmatprep.subr.mxu0 0.0
    %1162 = vmatpush1.msra.mxu0 0.0
    %1163 = vmatprep.subr.mxu0 0.0
    %1164 = vmatpush1.msra.mxu0 0.0
    %1165 = vmatprep.subr.mxu0 0.0
    %1166 = vmatpush1.msra.mxu0 0.0
    %1167 = vmatprep.subr.mxu0 0.0
    %1168 = vmatpush1.msra.mxu0 0.0
    %1169 = vmatprep.subr.mxu0 0.0
    %1170 = vmatpush1.msra.mxu0 0.0
    %1171 = vmatprep.subr.mxu0 0.0
    %1172 = vmatpush1.msra.mxu0 0.0
    %1173 = vmatprep.subr.mxu0 0.0
    %1174 = vmatpush1.msra.mxu0 0.0
    %1175 = vmatprep.subr.mxu0 0.0
    %1176 = vmatpush1.msra.mxu0 0.0
    %1177 = vmatprep.subr.mxu0 0.0
    %1178 = vmatpush1.msra.mxu0 0.0
    %1179 = vmatprep.subr.mxu0 0.0
    %1180 = vmatpush1.msra.mxu0 0.0
    %1181 = vmatprep.subr.mxu0 0.0
    %1182 = vmatpush1.msra.mxu0 0.0
    %1183 = vmatprep.subr.mxu0 0.0
    %1184 = vmatpush1.msra.mxu0 0.0
    %1185 = vmatprep.subr.mxu0 0.0
    %1186 = vmatpush1.msra.mxu0 0.0
    %1187 = vmatprep.subr.mxu0 0.0
    %1188 = vmatpush1.msra.mxu0 0.0
    %1189 = vmatprep.subr.mxu0 0.0
    %1190 = vmatpush1.msra.mxu0 0.0
    %1191 = vmatprep.subr.mxu0 0.0
    %1192 = vmatpush1.msra.mxu0 0.0
    %1193 = vmatprep.subr.mxu0 0.0
    %1194 = vmatpush1.msra.mxu0 0.0
    %1195 = vmatprep.subr.mxu0 0.0
    %1196 = vmatpush1.msra.mxu0 0.0
    %1197 = vmatprep.mubr.f32.mxu0 0.0
    %1198 = vmatmul.mubr.f32.gmra.mrb[0].mxu0 %v1131
    %v1199 = vpop.f32.mrb[0].mxu0
    %v1200 = vadd.f32 %v1128, %v1199
    %v1201 = vpop.f32.mrb[0].mxu0
    %1202 = vdwg.mxu0
    %v1203 = vmax.f32 %v1200, 0.0
    %v1204 = vlaneseq
    %v1205 = vshrl.u32 %v1204, 7
    %v1206 = vsub.s32 0, %v1205
    %v1207 = vrot.slane %v1120, %v1206
    %v1209 = vsel %vm380, %v1203, 0
    %1211 = vmatprep.subr.mxu0 0.0
    %1212 = vmatpush1.msra.mxu0 %v1112
    %1213 = vmatprep.subr.mxu0 0.0
    %1214 = vmatpush1.msra.mxu0 %v1113
    %1215 = vmatprep.subr.mxu0 0.0
    %1216 = vmatpush1.msra.mxu0 %v1114
    %1217 = vmatprep.subr.mxu0 0.0
    %1218 = vmatpush1.msra.mxu0 %v1115
    %1219 = vmatprep.subr.mxu0 0.0
    %1220 = vmatpush1.msra.mxu0 %v1116
    %1221 = vmatprep.subr.mxu0 0.0
    %1222 = vmatpush1.msra.mxu0 %v1117
    %1223 = vmatprep.subr.mxu0 0.0
    %1224 = vmatpush1.msra.mxu0 %v1118
    %1225 = vmatprep.subr.mxu0 0.0
    %1226 = vmatpush1.msra.mxu0 %v1119
    %1227 = vmatprep.subr.mxu0 0.0
    %1228 = vmatpush1.msra.mxu0 0.0
    %1229 = vmatprep.subr.mxu0 0.0
    %1230 = vmatpush1.msra.mxu0 0.0
    %1231 = vmatprep.subr.mxu0 0.0
    %1232 = vmatpush1.msra.mxu0 0.0
    %1233 = vmatprep.subr.mxu0 0.0
    %1234 = vmatpush1.msra.mxu0 0.0
    %1235 = vmatprep.subr.mxu0 0.0
    %1236 = vmatpush1.msra.mxu0 0.0
    %1237 = vmatprep.subr.mxu0 0.0
    %1238 = vmatpush1.msra.mxu0 0.0
    %1239 = vmatprep.subr.mxu0 0.0
    %1240 = vmatpush1.msra.mxu0 0.0
    %1241 = vmatprep.subr.mxu0 0.0
    %1242 = vmatpush1.msra.mxu0 0.0
    %1243 = vmatprep.subr.mxu0 0.0
    %1244 = vmatpush1.msra.mxu0 0.0
    %1245 = vmatprep.subr.mxu0 0.0
    %1246 = vmatpush1.msra.mxu0 0.0
    %1247 = vmatprep.subr.mxu0 0.0
    %1248 = vmatpush1.msra.mxu0 0.0
    %1249 = vmatprep.subr.mxu0 0.0
    %1250 = vmatpush1.msra.mxu0 0.0
    %1251 = vmatprep.subr.mxu0 0.0
    %1252 = vmatpush1.msra.mxu0 0.0
    %1253 = vmatprep.subr.mxu0 0.0
    %1254 = vmatpush1.msra.mxu0 0.0
    %1255 = vmatprep.subr.mxu0 0.0
    %1256 = vmatpush1.msra.mxu0 0.0
    %1257 = vmatprep.subr.mxu0 0.0
    %1258 = vmatpush1.msra.mxu0 0.0
    %1259 = vmatprep.subr.mxu0 0.0
    %1260 = vmatpush1.msra.mxu0 0.0
    %1261 = vmatprep.subr.mxu0 0.0
    %1262 = vmatpush1.msra.mxu0 0.0
    %1263 = vmatprep.subr.mxu0 0.0
    %1264 = vmatpush1.msra.mxu0 0.0
    %1265 = vmatprep.subr.mxu0 0.0
    %1266 = vmatpush1.msra.mxu0 0.0
    %1267 = vmatprep.subr.mxu0 0.0
    %1268 = vmatpush1.msra.mxu0 0.0
    %1269 = vmatprep.subr.mxu0 0.0
    %1270 = vmatpush1.msra.mxu0 0.0
    %1271 = vmatprep.subr.mxu0 0.0
    %1272 = vmatpush1.msra.mxu0 0.0
    %1273 = vmatprep.subr.mxu0 0.0
    %1274 = vmatpush1.msra.mxu0 0.0
    %1275 = vmatprep.mubr.f32.mxu0 0.0
    %1276 = vmatmul.mubr.f32.gmra.mrb[0].mxu0 %v1209
    %v1277 = vpop.f32.mrb[0].mxu0
    %v1278 = vadd.f32 %v1207, %v1277
    %v1279 = vpop.f32.mrb[0].mxu0
    %1280 = vdwg.mxu0
    %v1281 = vmax.f32 %v1278, 0.0
    %v1282 = vld [vmem:[#allocation7 + $0xe0] sm:$0xff]
    %v1283 = vld [vmem:[#allocation7 + $0xe8] sm:$0xff]
    %v1284 = vld [vmem:[#allocation7 + $0xf0] sm:$0xff]
    %v1285 = vld [vmem:[#allocation7 + $0xf8] sm:$0xff]
    %v1286 = vld [vmem:[#allocation7 + $0x100] sm:$0x1]
    %v1287 = vld [vmem:[#allocation7 + $0x108] sm:$0xff]
    %v1288 = vld [vmem:[#allocation7 + $0x110] sm:$0xff]
    %v1289 = vld [vmem:[#allocation7 + $0x118] sm:$0xff]
    %v1290 = vld [vmem:[#allocation7 + $0x120] sm:$0xff]
    %v1291 = vld [vmem:[#allocation7 + $0x128] sm:$0xff]
    %v1292 = vld [vmem:[#allocation7 + $0x130] sm:$0xff]
    %v1293 = vld [vmem:[#allocation7 + $0x138] sm:$0xff]
    %v1294 = vld [vmem:[#allocation7 + $0x140] sm:$0xff]
    %v1295 = vld [vmem:[#allocation7 + $0x148] sm:$0x1]
    %v1296 = vlaneseq
    %v1297 = vshrl.u32 %v1296, 7
    %v1298 = vsub.s32 0, %v1297
    %v1299 = vrot.slane %v1281, %v1298
    %v1300 = vmul.f32 %v671, %v1299
    %v1301 = vmul.f32 %v676, %v1299
    %v1302 = vmul.f32 %v681, %v1299
    %v1303 = vmul.f32 %v686, %v1299
    %v1304 = vlaneseq
    %v1305 = vshrl.u32 %v1304, 7
    %v1306 = vsub.s32 1, %v1305
    %v1307 = vrot.slane %v1281, %v1306
    %v1308 = vmul.f32 %v698, %v1307
    %v1309 = vmul.f32 %v702, %v1307
    %v1310 = vmul.f32 %v706, %v1307
    %v1311 = vmul.f32 %v710, %v1307
    %v1312 = vadd.f32 %v1300, %v1308
    %v1313 = vadd.f32 %v1301, %v1309
    %v1314 = vadd.f32 %v1302, %v1310
    %v1315 = vadd.f32 %v1303, %v1311
    %v1316 = vadd.f32 %v1103, %v1312
    %v1317 = vadd.f32 %v1104, %v1313
    %v1318 = vadd.f32 %v1105, %v1314
    %v1319 = vadd.f32 %v1106, %v1315
    %1320 = vmatprep.subr.mxu0 0.0
    %1321 = vmatpush1.msra.mxu0 %v1316
    %1322 = vmatprep.subr.mxu0 0.0
    %1323 = vmatpush1.msra.mxu0 %v1317
    %1324 = vmatprep.subr.mxu0 0.0
    %1325 = vmatpush1.msra.mxu0 %v1318
    %1326 = vmatprep.subr.mxu0 0.0
    %1327 = vmatpush1.msra.mxu0 %v1319
    %1328 = vmatprep.subr.mxu0 0.0
    %1329 = vmatpush1.msra.mxu0 0.0
    %1330 = vmatprep.subr.mxu0 0.0
    %1331 = vmatpush1.msra.mxu0 0.0
    %1332 = vmatprep.subr.mxu0 0.0
    %1333 = vmatpush1.msra.mxu0 0.0
    %1334 = vmatprep.subr.mxu0 0.0
    %1335 = vmatpush1.msra.mxu0 0.0
    %1336 = vmatprep.subr.mxu0 0.0
    %1337 = vmatpush1.msra.mxu0 0.0
    %1338 = vmatprep.subr.mxu0 0.0
    %1339 = vmatpush1.msra.mxu0 0.0
    %1340 = vmatprep.subr.mxu0 0.0
    %1341 = vmatpush1.msra.mxu0 0.0
    %1342 = vmatprep.subr.mxu0 0.0
    %1343 = vmatpush1.msra.mxu0 0.0
    %1344 = vmatprep.subr.mxu0 0.0
    %1345 = vmatpush1.msra.mxu0 0.0
    %1346 = vmatprep.subr.mxu0 0.0
    %1347 = vmatpush1.msra.mxu0 0.0
    %1348 = vmatprep.subr.mxu0 0.0
    %1349 = vmatpush1.msra.mxu0 0.0
    %1350 = vmatprep.subr.mxu0 0.0
    %1351 = vmatpush1.msra.mxu0 0.0
    %1352 = vmatprep.subr.mxu0 0.0
    %1353 = vmatpush1.msra.mxu0 0.0
    %1354 = vmatprep.subr.mxu0 0.0
    %1355 = vmatpush1.msra.mxu0 0.0
    %1356 = vmatprep.subr.mxu0 0.0
    %1357 = vmatpush1.msra.mxu0 0.0
    %1358 = vmatprep.subr.mxu0 0.0
    %1359 = vmatpush1.msra.mxu0 0.0
    %1360 = vmatprep.subr.mxu0 0.0
    %1361 = vmatpush1.msra.mxu0 0.0
    %1362 = vmatprep.subr.mxu0 0.0
    %1363 = vmatpush1.msra.mxu0 0.0
    %1364 = vmatprep.subr.mxu0 0.0
    %1365 = vmatpush1.msra.mxu0 0.0
    %1366 = vmatprep.subr.mxu0 0.0
    %1367 = vmatpush1.msra.mxu0 0.0
    %1368 = vmatprep.subr.mxu0 0.0
    %1369 = vmatpush1.msra.mxu0 0.0
    %1370 = vmatprep.subr.mxu0 0.0
    %1371 = vmatpush1.msra.mxu0 0.0
    %1372 = vmatprep.subr.mxu0 0.0
    %1373 = vmatpush1.msra.mxu0 0.0
    %1374 = vmatprep.subr.mxu0 0.0
    %1375 = vmatpush1.msra.mxu0 0.0
    %1376 = vmatprep.subr.mxu0 0.0
    %1377 = vmatpush1.msra.mxu0 0.0
    %1378 = vmatprep.subr.mxu0 0.0
    %1379 = vmatpush1.msra.mxu0 0.0
    %1380 = vmatprep.subr.mxu0 0.0
    %1381 = vmatpush1.msra.mxu0 0.0
    %1382 = vmatprep.subr.mxu0 0.0
    %1383 = vmatpush1.msra.mxu0 0.0
    %1384 = vmatprep.mubr.f32.mxu0 0.0
    %1385 = vmatmul.mubr.f32.gmra.mrb[0].mxu0 %v88
    %v1386 = vpop.f32.mrb[0].mxu0
    %v1387 = vadd.f32 0.0, %v1386
    %v1388 = vpop.f32.mrb[0].mxu0
    %1389 = vdwg.mxu0
    %1391 = vrot.lane.b32.xlu0 %v1387, 96
    %v1392 = vpop.permute.xlu0 %1391
    %vm1394 = vcmask 1042176
    %1395 = vst.msk [vmem:[#allocation8] sm:$0x3] %vm1394, %v1392
    %v1396 = vmax.f32 %v1316, 0.0
    %v1397 = vmax.f32 %v1317, 0.0
    %v1398 = vmax.f32 %v1318, 0.0
    %v1399 = vmax.f32 %v1319, 0.0
    %1400 = vmatprep.subr.mxu0 0.0
    %1401 = vmatpush1.msra.mxu0 %v1396
    %1402 = vmatprep.subr.mxu0 0.0
    %1403 = vmatpush1.msra.mxu0 %v1397
    %1404 = vmatprep.subr.mxu0 0.0
    %1405 = vmatpush1.msra.mxu0 %v1398
    %1406 = vmatprep.subr.mxu0 0.0
    %1407 = vmatpush1.msra.mxu0 %v1399
    %1408 = vmatprep.subr.mxu0 0.0
    %1409 = vmatpush1.msra.mxu0 0.0
    %1410 = vmatprep.subr.mxu0 0.0
    %1411 = vmatpush1.msra.mxu0 0.0
    %1412 = vmatprep.subr.mxu0 0.0
    %1413 = vmatpush1.msra.mxu0 0.0
    %1414 = vmatprep.subr.mxu0 0.0
    %1415 = vmatpush1.msra.mxu0 0.0
    %1416 = vmatprep.subr.mxu0 0.0
    %1417 = vmatpush1.msra.mxu0 0.0
    %1418 = vmatprep.subr.mxu0 0.0
    %1419 = vmatpush1.msra.mxu0 0.0
    %1420 = vmatprep.subr.mxu0 0.0
    %1421 = vmatpush1.msra.mxu0 0.0
    %1422 = vmatprep.subr.mxu0 0.0
    %1423 = vmatpush1.msra.mxu0 0.0
    %1424 = vmatprep.subr.mxu0 0.0
    %1425 = vmatpush1.msra.mxu0 0.0
    %1426 = vmatprep.subr.mxu0 0.0
    %1427 = vmatpush1.msra.mxu0 0.0
    %1428 = vmatprep.subr.mxu0 0.0
    %1429 = vmatpush1.msra.mxu0 0.0
    %1430 = vmatprep.subr.mxu0 0.0
    %1431 = vmatpush1.msra.mxu0 0.0
    %1432 = vmatprep.subr.mxu0 0.0
    %1433 = vmatpush1.msra.mxu0 0.0
    %1434 = vmatprep.subr.mxu0 0.0
    %1435 = vmatpush1.msra.mxu0 0.0
    %1436 = vmatprep.subr.mxu0 0.0
    %1437 = vmatpush1.msra.mxu0 0.0
    %1438 = vmatprep.subr.mxu0 0.0
    %1439 = vmatpush1.msra.mxu0 0.0
    %1440 = vmatprep.subr.mxu0 0.0
    %1441 = vmatpush1.msra.mxu0 0.0
    %1442 = vmatprep.subr.mxu0 0.0
    %1443 = vmatpush1.msra.mxu0 0.0
    %1444 = vmatprep.subr.mxu0 0.0
    %1445 = vmatpush1.msra.mxu0 0.0
    %1446 = vmatprep.subr.mxu0 0.0
    %1447 = vmatpush1.msra.mxu0 0.0
    %1448 = vmatprep.subr.mxu0 0.0
    %1449 = vmatpush1.msra.mxu0 0.0
    %1450 = vmatprep.subr.mxu0 0.0
    %1451 = vmatpush1.msra.mxu0 0.0
    %1452 = vmatprep.subr.mxu0 0.0
    %1453 = vmatpush1.msra.mxu0 0.0
    %1454 = vmatprep.subr.mxu0 0.0
    %1455 = vmatpush1.msra.mxu0 0.0
    %1456 = vmatprep.subr.mxu0 0.0
    %1457 = vmatpush1.msra.mxu0 0.0
    %1458 = vmatprep.subr.mxu0 0.0
    %1459 = vmatpush1.msra.mxu0 0.0
    %1460 = vmatprep.subr.mxu0 0.0
    %1461 = vmatpush1.msra.mxu0 0.0
    %1462 = vmatprep.subr.mxu0 0.0
    %1463 = vmatpush1.msra.mxu0 0.0
    %1464 = vmatprep.mubr.f32.mxu0 0.0
    %1465 = vmatmul.mubr.f32.gmra.mrb[0].mxu0 %v171
    %v1466 = vpop.f32.mrb[0].mxu0
    %v1467 = vadd.f32 0.0, %v1466
    %v1468 = vpop.f32.mrb[0].mxu0
    %1469 = vmatprep.mubr.f32.mxu0 0.0
    %1470 = vmatmul.mubr.f32.gmra.mrb[0].mxu0 %v174
    %v1471 = vpop.f32.mrb[0].mxu0
    %v1472 = vadd.f32 0.0, %v1471
    %v1473 = vpop.f32.mrb[0].mxu0
    %1474 = vmatprep.mubr.f32.mxu0 0.0
    %1475 = vmatmul.mubr.f32.gmra.mrb[0].mxu0 %v177
    %v1476 = vpop.f32.mrb[0].mxu0
    %v1477 = vadd.f32 0.0, %v1476
    %v1478 = vpop.f32.mrb[0].mxu0
    %1479 = vmatprep.mubr.f32.mxu0 0.0
    %1480 = vmatmul.mubr.f32.gmra.mrb[0].mxu0 %v180
    %v1481 = vpop.f32.mrb[0].mxu0
    %v1482 = vadd.f32 0.0, %v1481
    %v1483 = vpop.f32.mrb[0].mxu0
    %1484 = vdwg.mxu0
    %v1485 = vadd.f32 %v1316, %v1467
    %v1486 = vadd.f32 %v1317, %v1472
    %v1487 = vadd.f32 %v1318, %v1477
    %v1488 = vadd.f32 %v1319, %v1482
    %v1489 = vlaneseq
    %v1490 = vshrl.u32 %v1489, 7
    %v1491 = vsub.s32 0, %v1490
    %v1492 = vrot.slane %v1286, %v1491
    %v1494 = vsel %vm86, %v1485, 0
    %v1497 = vsel %vm86, %v1486, 0
    %v1500 = vsel %vm86, %v1487, 0
    %v1503 = vsel %vm86, %v1488, 0
    %1505 = vmatprep.subr.mxu0 0.0
    %1506 = vmatpush1.msra.mxu0 %v1282
    %1507 = vmatprep.subr.mxu0 0.0
    %1508 = vmatpush1.msra.mxu0 %v1283
    %1509 = vmatprep.subr.mxu0 0.0
    %1510 = vmatpush1.msra.mxu0 %v1284
    %1511 = vmatprep.subr.mxu0 0.0
    %1512 = vmatpush1.msra.mxu0 %v1285
    %1513 = vmatprep.subr.mxu0 0.0
    %1514 = vmatpush1.msra.mxu0 0.0
    %1515 = vmatprep.subr.mxu0 0.0
    %1516 = vmatpush1.msra.mxu0 0.0
    %1517 = vmatprep.subr.mxu0 0.0
    %1518 = vmatpush1.msra.mxu0 0.0
    %1519 = vmatprep.subr.mxu0 0.0
    %1520 = vmatpush1.msra.mxu0 0.0
    %1521 = vmatprep.subr.mxu0 0.0
    %1522 = vmatpush1.msra.mxu0 0.0
    %1523 = vmatprep.subr.mxu0 0.0
    %1524 = vmatpush1.msra.mxu0 0.0
    %1525 = vmatprep.subr.mxu0 0.0
    %1526 = vmatpush1.msra.mxu0 0.0
    %1527 = vmatprep.subr.mxu0 0.0
    %1528 = vmatpush1.msra.mxu0 0.0
    %1529 = vmatprep.subr.mxu0 0.0
    %1530 = vmatpush1.msra.mxu0 0.0
    %1531 = vmatprep.subr.mxu0 0.0
    %1532 = vmatpush1.msra.mxu0 0.0
    %1533 = vmatprep.subr.mxu0 0.0
    %1534 = vmatpush1.msra.mxu0 0.0
    %1535 = vmatprep.subr.mxu0 0.0
    %1536 = vmatpush1.msra.mxu0 0.0
    %1537 = vmatprep.subr.mxu0 0.0
    %1538 = vmatpush1.msra.mxu0 0.0
    %1539 = vmatprep.subr.mxu0 0.0
    %1540 = vmatpush1.msra.mxu0 0.0
    %1541 = vmatprep.subr.mxu0 0.0
    %1542 = vmatpush1.msra.mxu0 0.0
    %1543 = vmatprep.subr.mxu0 0.0
    %1544 = vmatpush1.msra.mxu0 0.0
    %1545 = vmatprep.subr.mxu0 0.0
    %1546 = vmatpush1.msra.mxu0 0.0
    %1547 = vmatprep.subr.mxu0 0.0
    %1548 = vmatpush1.msra.mxu0 0.0
    %1549 = vmatprep.subr.mxu0 0.0
    %1550 = vmatpush1.msra.mxu0 0.0
    %1551 = vmatprep.subr.mxu0 0.0
    %1552 = vmatpush1.msra.mxu0 0.0
    %1553 = vmatprep.subr.mxu0 0.0
    %1554 = vmatpush1.msra.mxu0 0.0
    %1555 = vmatprep.subr.mxu0 0.0
    %1556 = vmatpush1.msra.mxu0 0.0
    %1557 = vmatprep.subr.mxu0 0.0
    %1558 = vmatpush1.msra.mxu0 0.0
    %1559 = vmatprep.subr.mxu0 0.0
    %1560 = vmatpush1.msra.mxu0 0.0
    %1561 = vmatprep.subr.mxu0 0.0
    %1562 = vmatpush1.msra.mxu0 0.0
    %1563 = vmatprep.subr.mxu0 0.0
    %1564 = vmatpush1.msra.mxu0 0.0
    %1565 = vmatprep.subr.mxu0 0.0
    %1566 = vmatpush1.msra.mxu0 0.0
    %1567 = vmatprep.subr.mxu0 0.0
    %1568 = vmatpush1.msra.mxu0 0.0
    %1569 = vmatprep.mubr.f32.mxu0 0.0
    %1570 = vmatmul.mubr.f32.gmra.mrb[0].mxu0 %v1494
    %v1571 = vpop.f32.mrb[0].mxu0
    %v1572 = vadd.f32 %v1492, %v1571
    %v1573 = vpop.f32.mrb[0].mxu0
    %1574 = vmatprep.mubr.f32.mxu0 0.0
    %1575 = vmatmul.mubr.f32.gmra.mrb[0].mxu0 %v1497
    %v1576 = vpop.f32.mrb[0].mxu0
    %v1577 = vadd.f32 %v1492, %v1576
    %v1578 = vpop.f32.mrb[0].mxu0
    %1579 = vmatprep.mubr.f32.mxu0 0.0
    %1580 = vmatmul.mubr.f32.gmra.mrb[0].mxu0 %v1500
    %v1581 = vpop.f32.mrb[0].mxu0
    %v1582 = vadd.f32 %v1492, %v1581
    %v1583 = vpop.f32.mrb[0].mxu0
    %1584 = vmatprep.mubr.f32.mxu0 0.0
    %1585 = vmatmul.mubr.f32.gmra.mrb[0].mxu0 %v1503
    %v1586 = vpop.f32.mrb[0].mxu0
    %v1587 = vadd.f32 %v1492, %v1586
    %v1588 = vpop.f32.mrb[0].mxu0
    %1589 = vdwg.mxu0
    %v1590 = vmax.f32 %v1572, 0.0
    %v1591 = vmax.f32 %v1577, 0.0
    %v1592 = vmax.f32 %v1582, 0.0
    %v1593 = vmax.f32 %v1587, 0.0
    %v1594 = vlaneseq
    %v1595 = vshrl.u32 %v1594, 7
    %v1596 = vsub.s32 0, %v1595
    %v1597 = vrot.slane %v1295, %v1596
    %v1599 = vsel %vm380, %v1590, 0
    %v1602 = vsel %vm380, %v1591, 0
    %v1605 = vsel %vm380, %v1592, 0
    %v1608 = vsel %vm380, %v1593, 0
    %1610 = vmatprep.subr.mxu0 0.0
    %1611 = vmatpush1.msra.mxu0 %v1287
    %1612 = vmatprep.subr.mxu0 0.0
    %1613 = vmatpush1.msra.mxu0 %v1288
    %1614 = vmatprep.subr.mxu0 0.0
    %1615 = vmatpush1.msra.mxu0 %v1289
    %1616 = vmatprep.subr.mxu0 0.0
    %1617 = vmatpush1.msra.mxu0 %v1290
    %1618 = vmatprep.subr.mxu0 0.0
    %1619 = vmatpush1.msra.mxu0 %v1291
    %1620 = vmatprep.subr.mxu0 0.0
    %1621 = vmatpush1.msra.mxu0 %v1292
    %1622 = vmatprep.subr.mxu0 0.0
    %1623 = vmatpush1.msra.mxu0 %v1293
    %1624 = vmatprep.subr.mxu0 0.0
    %1625 = vmatpush1.msra.mxu0 %v1294
    %1626 = vmatprep.subr.mxu0 0.0
    %1627 = vmatpush1.msra.mxu0 0.0
    %1628 = vmatprep.subr.mxu0 0.0
    %1629 = vmatpush1.msra.mxu0 0.0
    %1630 = vmatprep.subr.mxu0 0.0
    %1631 = vmatpush1.msra.mxu0 0.0
    %1632 = vmatprep.subr.mxu0 0.0
    %1633 = vmatpush1.msra.mxu0 0.0
    %1634 = vmatprep.subr.mxu0 0.0
    %1635 = vmatpush1.msra.mxu0 0.0
    %1636 = vmatprep.subr.mxu0 0.0
    %1637 = vmatpush1.msra.mxu0 0.0
    %1638 = vmatprep.subr.mxu0 0.0
    %1639 = vmatpush1.msra.mxu0 0.0
    %1640 = vmatprep.subr.mxu0 0.0
    %1641 = vmatpush1.msra.mxu0 0.0
    %1642 = vmatprep.subr.mxu0 0.0
    %1643 = vmatpush1.msra.mxu0 0.0
    %1644 = vmatprep.subr.mxu0 0.0
    %1645 = vmatpush1.msra.mxu0 0.0
    %1646 = vmatprep.subr.mxu0 0.0
    %1647 = vmatpush1.msra.mxu0 0.0
    %1648 = vmatprep.subr.mxu0 0.0
    %1649 = vmatpush1.msra.mxu0 0.0
    %1650 = vmatprep.subr.mxu0 0.0
    %1651 = vmatpush1.msra.mxu0 0.0
    %1652 = vmatprep.subr.mxu0 0.0
    %1653 = vmatpush1.msra.mxu0 0.0
    %1654 = vmatprep.subr.mxu0 0.0
    %1655 = vmatpush1.msra.mxu0 0.0
    %1656 = vmatprep.subr.mxu0 0.0
    %1657 = vmatpush1.msra.mxu0 0.0
    %1658 = vmatprep.subr.mxu0 0.0
    %1659 = vmatpush1.msra.mxu0 0.0
    %1660 = vmatprep.subr.mxu0 0.0
    %1661 = vmatpush1.msra.mxu0 0.0
    %1662 = vmatprep.subr.mxu0 0.0
    %1663 = vmatpush1.msra.mxu0 0.0
    %1664 = vmatprep.subr.mxu0 0.0
    %1665 = vmatpush1.msra.mxu0 0.0
    %1666 = vmatprep.subr.mxu0 0.0
    %1667 = vmatpush1.msra.mxu0 0.0
    %1668 = vmatprep.subr.mxu0 0.0
    %1669 = vmatpush1.msra.mxu0 0.0
    %1670 = vmatprep.subr.mxu0 0.0
    %1671 = vmatpush1.msra.mxu0 0.0
    %1672 = vmatprep.subr.mxu0 0.0
    %1673 = vmatpush1.msra.mxu0 0.0
    %1674 = vmatprep.mubr.f32.mxu0 0.0
    %1675 = vmatmul.mubr.f32.gmra.mrb[0].mxu0 %v1599
    %v1676 = vpop.f32.mrb[0].mxu0
    %v1677 = vadd.f32 %v1597, %v1676
    %v1678 = vpop.f32.mrb[0].mxu0
    %1679 = vmatprep.mubr.f32.mxu0 0.0
    %1680 = vmatmul.mubr.f32.gmra.mrb[0].mxu0 %v1602
    %v1681 = vpop.f32.mrb[0].mxu0
    %v1682 = vadd.f32 %v1597, %v1681
    %v1683 = vpop.f32.mrb[0].mxu0
    %1684 = vmatprep.mubr.f32.mxu0 0.0
    %1685 = vmatmul.mubr.f32.gmra.mrb[0].mxu0 %v1605
    %v1686 = vpop.f32.mrb[0].mxu0
    %v1687 = vadd.f32 %v1597, %v1686
    %v1688 = vpop.f32.mrb[0].mxu0
    %1689 = vmatprep.mubr.f32.mxu0 0.0
    %1690 = vmatmul.mubr.f32.gmra.mrb[0].mxu0 %v1608
    %v1691 = vpop.f32.mrb[0].mxu0
    %v1692 = vadd.f32 %v1597, %v1691
    %v1693 = vpop.f32.mrb[0].mxu0
    %1694 = vdwg.mxu0
    %1695 = vmatprep.subr.mxu0 0.0
    %1696 = vmatpush1.msra.mxu0 %v1677
    %1697 = vmatprep.subr.mxu0 0.0
    %1698 = vmatpush1.msra.mxu0 %v1682
    %1699 = vmatprep.subr.mxu0 0.0
    %1700 = vmatpush1.msra.mxu0 %v1687
    %1701 = vmatprep.subr.mxu0 0.0
    %1702 = vmatpush1.msra.mxu0 %v1692
    %1703 = vmatprep.subr.mxu0 0.0
    %1704 = vmatpush1.msra.mxu0 0.0
    %1705 = vmatprep.subr.mxu0 0.0
    %1706 = vmatpush1.msra.mxu0 0.0
    %1707 = vmatprep.subr.mxu0 0.0
    %1708 = vmatpush1.msra.mxu0 0.0
    %1709 = vmatprep.subr.mxu0 0.0
    %1710 = vmatpush1.msra.mxu0 0.0
    %1711 = vmatprep.subr.mxu0 0.0
    %1712 = vmatpush1.msra.mxu0 0.0
    %1713 = vmatprep.subr.mxu0 0.0
    %1714 = vmatpush1.msra.mxu0 0.0
    %1715 = vmatprep.subr.mxu0 0.0
    %1716 = vmatpush1.msra.mxu0 0.0
    %1717 = vmatprep.subr.mxu0 0.0
    %1718 = vmatpush1.msra.mxu0 0.0
    %1719 = vmatprep.subr.mxu0 0.0
    %1720 = vmatpush1.msra.mxu0 0.0
    %1721 = vmatprep.subr.mxu0 0.0
    %1722 = vmatpush1.msra.mxu0 0.0
    %1723 = vmatprep.subr.mxu0 0.0
    %1724 = vmatpush1.msra.mxu0 0.0
    %1725 = vmatprep.subr.mxu0 0.0
    %1726 = vmatpush1.msra.mxu0 0.0
    %1727 = vmatprep.subr.mxu0 0.0
    %1728 = vmatpush1.msra.mxu0 0.0
    %1729 = vmatprep.subr.mxu0 0.0
    %1730 = vmatpush1.msra.mxu0 0.0
    %1731 = vmatprep.subr.mxu0 0.0
    %1732 = vmatpush1.msra.mxu0 0.0
    %1733 = vmatprep.subr.mxu0 0.0
    %1734 = vmatpush1.msra.mxu0 0.0
    %1735 = vmatprep.subr.mxu0 0.0
    %1736 = vmatpush1.msra.mxu0 0.0
    %1737 = vmatprep.subr.mxu0 0.0
    %1738 = vmatpush1.msra.mxu0 0.0
    %1739 = vmatprep.subr.mxu0 0.0
    %1740 = vmatpush1.msra.mxu0 0.0
    %1741 = vmatprep.subr.mxu0 0.0
    %1742 = vmatpush1.msra.mxu0 0.0
    %1743 = vmatprep.subr.mxu0 0.0
    %1744 = vmatpush1.msra.mxu0 0.0
    %1745 = vmatprep.subr.mxu0 0.0
    %1746 = vmatpush1.msra.mxu0 0.0
    %1747 = vmatprep.subr.mxu0 0.0
    %1748 = vmatpush1.msra.mxu0 0.0
    %1749 = vmatprep.subr.mxu0 0.0
    %1750 = vmatpush1.msra.mxu0 0.0
    %1751 = vmatprep.subr.mxu0 0.0
    %1752 = vmatpush1.msra.mxu0 0.0
    %1753 = vmatprep.subr.mxu0 0.0
    %1754 = vmatpush1.msra.mxu0 0.0
    %1755 = vmatprep.subr.mxu0 0.0
    %1756 = vmatpush1.msra.mxu0 0.0
    %1757 = vmatprep.subr.mxu0 0.0
    %1758 = vmatpush1.msra.mxu0 0.0
    %1759 = vmatprep.mubr.f32.mxu0 0.0
    %1760 = vmatmul.mubr.f32.gmra.mrb[0].mxu0 %v88
    %v1761 = vpop.f32.mrb[0].mxu0
    %v1762 = vadd.f32 0.0, %v1761
    %v1763 = vpop.f32.mrb[0].mxu0
    %1764 = vdwg.mxu0
    %vm1765 = vcmask 254976
    %1766 = vst.msk [vmem:[#allocation8] sm:$0x3] %vm1765, %v1762
    %v1767 = vld [vmem:[#allocation7 + $0x230] sm:$0xff]
    %v1768 = vld [vmem:[#allocation7 + $0x238] sm:$0xff]
    %v1769 = vld [vmem:[#allocation7 + $0x240] sm:$0xff]
    %v1770 = vld [vmem:[#allocation7 + $0x248] sm:$0xff]
    %v1771 = vld [vmem:[#allocation7 + $0x250] sm:$0x1]
    %v1772 = vlaneseq
    %v1773 = vshrl.u32 %v1772, 7
    %v1774 = vsub.s32 0, %v1773
    %v1775 = vrot.slane %v1771, %v1774
    %v1777 = vsel %vm86, %v1762, 0
    %1779 = vmatprep.subr.mxu0 0.0
    %1780 = vmatpush1.msra.mxu0 %v1767
    %1781 = vmatprep.subr.mxu0 0.0
    %1782 = vmatpush1.msra.mxu0 %v1768
    %1783 = vmatprep.subr.mxu0 0.0
    %1784 = vmatpush1.msra.mxu0 %v1769
    %1785 = vmatprep.subr.mxu0 0.0
    %1786 = vmatpush1.msra.mxu0 %v1770
    %1787 = vmatprep.subr.mxu0 0.0
    %1788 = vmatpush1.msra.mxu0 0.0
    %1789 = vmatprep.subr.mxu0 0.0
    %1790 = vmatpush1.msra.mxu0 0.0
    %1791 = vmatprep.subr.mxu0 0.0
    %1792 = vmatpush1.msra.mxu0 0.0
    %1793 = vmatprep.subr.mxu0 0.0
    %1794 = vmatpush1.msra.mxu0 0.0
    %1795 = vmatprep.subr.mxu0 0.0
    %1796 = vmatpush1.msra.mxu0 0.0
    %1797 = vmatprep.subr.mxu0 0.0
    %1798 = vmatpush1.msra.mxu0 0.0
    %1799 = vmatprep.subr.mxu0 0.0
    %1800 = vmatpush1.msra.mxu0 0.0
    %1801 = vmatprep.subr.mxu0 0.0
    %1802 = vmatpush1.msra.mxu0 0.0
    %1803 = vmatprep.subr.mxu0 0.0
    %1804 = vmatpush1.msra.mxu0 0.0
    %1805 = vmatprep.subr.mxu0 0.0
    %1806 = vmatpush1.msra.mxu0 0.0
    %1807 = vmatprep.subr.mxu0 0.0
    %1808 = vmatpush1.msra.mxu0 0.0
    %1809 = vmatprep.subr.mxu0 0.0
    %1810 = vmatpush1.msra.mxu0 0.0
    %1811 = vmatprep.subr.mxu0 0.0
    %1812 = vmatpush1.msra.mxu0 0.0
    %1813 = vmatprep.subr.mxu0 0.0
    %1814 = vmatpush1.msra.mxu0 0.0
    %1815 = vmatprep.subr.mxu0 0.0
    %1816 = vmatpush1.msra.mxu0 0.0
    %1817 = vmatprep.subr.mxu0 0.0
    %1818 = vmatpush1.msra.mxu0 0.0
    %1819 = vmatprep.subr.mxu0 0.0
    %1820 = vmatpush1.msra.mxu0 0.0
    %1821 = vmatprep.subr.mxu0 0.0
    %1822 = vmatpush1.msra.mxu0 0.0
    %1823 = vmatprep.subr.mxu0 0.0
    %1824 = vmatpush1.msra.mxu0 0.0
    %1825 = vmatprep.subr.mxu0 0.0
    %1826 = vmatpush1.msra.mxu0 0.0
    %1827 = vmatprep.subr.mxu0 0.0
    %1828 = vmatpush1.msra.mxu0 0.0
    %1829 = vmatprep.subr.mxu0 0.0
    %1830 = vmatpush1.msra.mxu0 0.0
    %1831 = vmatprep.subr.mxu0 0.0
    %1832 = vmatpush1.msra.mxu0 0.0
    %1833 = vmatprep.subr.mxu0 0.0
    %1834 = vmatpush1.msra.mxu0 0.0
    %1835 = vmatprep.subr.mxu0 0.0
    %1836 = vmatpush1.msra.mxu0 0.0
    %1837 = vmatprep.subr.mxu0 0.0
    %1838 = vmatpush1.msra.mxu0 0.0
    %1839 = vmatprep.subr.mxu0 0.0
    %1840 = vmatpush1.msra.mxu0 0.0
    %1841 = vmatprep.subr.mxu0 0.0
    %1842 = vmatpush1.msra.mxu0 0.0
    %1843 = vmatprep.mubr.f32.mxu0 0.0
    %1844 = vmatmul.mubr.f32.gmra.mrb[0].mxu0 %v1777
    %v1845 = vpop.f32.mrb[0].mxu0
    %v1846 = vadd.f32 %v1775, %v1845
    %v1847 = vpop.f32.mrb[0].mxu0
    %1848 = vdwg.mxu0
    %1849 = vst [vmem:[#allocation9] sm:$0x3] %v1846
    // Predicated region
    $region26: #{tpu_custom_call.1} parent=1 // pred_check
      _
    $region27: #{tpu_custom_call.1} parent=1 // pred_check_branch
      %1851 = sbr.rel (0) target = $region29
    $region28: #{tpu_custom_call.1} parent=1 // pred_region
      %s1853 = ssub.s32 32, 32
      %1854 = vsyncadd [#allocation4], %s1853
      %s1856 = sshll.u32 [#allocation8], 4
      %s1857 = int_to_ptr.vmem [resolvable:$true] %s1856
      %1859 = dma.vmem_to_hbm [thread:$0]  %s1857, 32, %s3, [#allocation4]
    $region29: #{tpu_custom_call.1} parent=1 // pred_fallthru
      _
    // Predicated region
    $region30: #{tpu_custom_call.1} parent=1 // pred_check
      _
    $region31: #{tpu_custom_call.1} parent=1 // pred_check_branch
      %1861 = sbr.rel (0) target = $region33
    $region32: #{tpu_custom_call.1} parent=1 // pred_region
      %s1863 = ssub.s32 32, 32
      %1864 = vsyncadd [#allocation10], %s1863
      %s1866 = sshll.u32 [#allocation9], 4
      %s1867 = int_to_ptr.vmem [resolvable:$true] %s1866
      %1869 = dma.vmem_to_hbm [thread:$0]  %s1867, 32, %s4, [#allocation10]
    $region33: #{tpu_custom_call.1} parent=1 // pred_fallthru
      _
    // Predicated region
    $region34: #{tpu_custom_call.1} parent=1 // pred_check
      _
    $region35: #{tpu_custom_call.1} parent=1 // pred_check_branch
      %1871 = sbr.rel (0) target = $region37
    $region36: #{tpu_custom_call.1} parent=1 // pred_region
      %1872 = dma.done [#allocation4], 32
    $region37: #{tpu_custom_call.1} parent=1 // pred_fallthru
      _
    // Predicated region
    $region38: #{tpu_custom_call.1} parent=1 // pred_check
      _
    $region39: #{tpu_custom_call.1} parent=1 // pred_check_branch
      %1874 = sbr.rel (0) target = $region41
    $region40: #{tpu_custom_call.1} parent=1 // pred_region
      %1875 = dma.done [#allocation10], 32
    $region41: #{tpu_custom_call.1} parent=1 // pred_fallthru
      _
    %1876 = vsyncpa [#allocation3], 1
    %1877 = vsyncpa [#allocation6], 1
    %1878 = vsyncpa [#allocation4], 1
    %1879 = vsyncpa [#allocation10], 1

</llo_original>
